<compile_context>
chip_gen: v6e
topology: v6e:2x2x1
jax: 0.10.0
libtpu: 0.0.40
codegen_flags: <defaults>
</compile_context>

<pallas_src>
import functools

import jax
import jax.numpy as jnp
from jax import lax
from jax.experimental import pallas as pl
from jax.experimental.pallas import tpu as pltpu


def _attention_block_kernel(x_ref, wqkv_ref, bqkv_ref, wout_ref, bout_ref,
                            o_ref, *, n_heads, d_k, batch_block, matmul_dtype,
                            approx_recip):
    # x_ref   : VMEM (bb, C, S)   channels-first slab(s) for this grid step (f32)
    # wqkv_ref: VMEM (3*H*d_k, C) QKV weight, rows regrouped head-major [Q|K|V], scale folded into Q
    # bqkv_ref: VMEM (3*H*d_k, 1) matching bias column (f32, scale folded into Q part)
    # wout_ref: VMEM (C, H*d_k)   output weight in native PyTorch (out, in) layout
    # bout_ref: VMEM (C, 1)       output bias column (f32)
    # o_ref   : VMEM (bb, C, S)
    S = x_ref.shape[-1]
    hd = n_heads * d_k

    for b in range(batch_block):                 # static, unrolled (batch_block is small)
        x = x_ref[b]                             # (C, S) f32
        xm = x.astype(matmul_dtype)

        # QKV projection on the MXU: (3*H*d_k, C) @ (C, S) -> (3*H*d_k, S), f32 accumulate.
        qkv = jnp.dot(wqkv_ref[...], xm,
                      preferred_element_type=jnp.float32) + bqkv_ref[...]
        # Sublane-aligned split (d_k is a multiple of 8): leading-dim slices are free slabs.
        qkv = qkv.reshape(3 * n_heads, d_k, S)
        q = qkv[:n_heads]                        # (H, d_k, S), 1/sqrt(d_k) already folded in
        k = qkv[n_heads:2 * n_heads]             # (H, d_k, S)
        v = qkv[2 * n_heads:]                    # (H, d_k, S)

        # One small transpose of q (the d_k x S operand) so both batched dots use the
        # canonical / transpose-rhs forms the MXU handles directly.
        qm = jnp.swapaxes(q.astype(matmul_dtype), 1, 2)      # (H, S, d_k)
        km = k.astype(matmul_dtype)                          # (H, d_k, S)
        vm = v.astype(matmul_dtype)                          # (H, d_k, S)

        # scores[h, i, j] = sum_d q[h, i, d] * k[h, d, j]   (batched over heads)
        s = lax.dot_general(qm, km, (((2,), (1,)), ((0,), (0,))),
                            preferred_element_type=jnp.float32)       # (H, S, S)

        # Row-wise softmax over keys (f32).
        s = s - jnp.max(s, axis=-1, keepdims=True)
        p = jnp.exp(s)
        denom = jnp.sum(p, axis=-1, keepdims=True)
        p = p * pl.reciprocal(denom, approx=approx_recip)
        pm = p.astype(matmul_dtype)

        # ctx[h, d, i] = sum_j v[h, d, j] * p[h, i, j]      (batched over heads)
        ctx = lax.dot_general(vm, pm, (((2,), (2,)), ((0,), (0,))),
                              preferred_element_type=jnp.float32)     # (H, d_k, S)
        ctxm = ctx.reshape(hd, S).astype(matmul_dtype)                # (H*d_k, S)

        # Output projection + bias + residual; lane-dense (C, S) store.
        out = jnp.dot(wout_ref[...], ctxm,
                      preferred_element_type=jnp.float32) + bout_ref[...]   # (C, S)
        o_ref[b] = (out + x).astype(o_ref.dtype)


def attention_block(x, w_proj, b_proj, w_out, b_out, *, n_heads, d_k,
                    matmul_dtype=jnp.bfloat16, approx_recip=True):
    """AttentionBlock forward.

    x      : (B, C, H, W) float32
    w_proj : (3*n_heads*d_k, C)  PyTorch nn.Linear weight layout (out, in)
    b_proj : (3*n_heads*d_k,)
    w_out  : (C, n_heads*d_k)
    b_out  : (C,)
    returns: (B, C, H, W) float32
    """
    B, C, H, W = x.shape
    S = H * W
    hd = n_heads * d_k
    scale = float(d_k) ** -0.5

    # ---- one-time, wrapper-side weight surgery (constant-folded by XLA) ----
    # PyTorch layout: projection output is per-head [q|k|v] chunks
    # (qkv.view(B,S,H,3*d_k) then chunk(3, dim=-1)).  Regroup rows head-major as
    # [Q(all heads) | K(all heads) | V(all heads)] so the kernel slices q/k/v as
    # contiguous sublane-aligned slabs, and fold the 1/sqrt(d_k) scale into Q.
    w_r = w_proj.reshape(n_heads, 3, d_k, C).transpose(1, 0, 2, 3)   # (3, H, d_k, C)
    b_r = b_proj.reshape(n_heads, 3, d_k).transpose(1, 0, 2)         # (3, H, d_k)
    w_r = w_r.at[0].multiply(scale)
    b_r = b_r.at[0].multiply(scale)
    wqkv = w_r.reshape(3 * hd, C).astype(matmul_dtype)               # (3*H*d_k, C)
    bqkv = b_r.reshape(3 * hd, 1).astype(jnp.float32)                # column bias
    wout = w_out.astype(matmul_dtype)                                # (C, H*d_k) — no transpose needed
    bout = b_out.reshape(C, 1).astype(jnp.float32)

    # Channels-first: (B, C, H, W) -> (B, C, S) is a free view (no HBM transpose).
    x_cs = x.reshape(B, C, S).astype(jnp.float32)

    # Batch elements per grid step: at most 2 grid steps total (both v7x TensorCores fed,
    # per-step overhead negligible on single-TC v5e / v6e).
    bb = B // 2 if (B >= 2 and B % 2 == 0) else 1
    grid = (B // bb,)

    kernel = functools.partial(
        _attention_block_kernel, n_heads=n_heads, d_k=d_k, batch_block=bb,
        matmul_dtype=matmul_dtype, approx_recip=approx_recip)

    out_cs = pl.pallas_call(
        kernel,
        out_shape=jax.ShapeDtypeStruct((B, C, S), jnp.float32),
        grid=grid,
        in_specs=[
            pl.BlockSpec((bb, C, S), lambda i: (i, 0, 0)),       # x (channels-first)
            pl.BlockSpec((3 * hd, C), lambda i: (0, 0)),         # regrouped W_qkv
            pl.BlockSpec((3 * hd, 1), lambda i: (0, 0)),         # b_qkv column
            pl.BlockSpec((C, hd), lambda i: (0, 0)),             # W_out (native layout)
            pl.BlockSpec((C, 1), lambda i: (0, 0)),              # b_out column
        ],
        out_specs=pl.BlockSpec((bb, C, S), lambda i: (i, 0, 0)),
        compiler_params=pltpu.CompilerParams(
            dimension_semantics=("parallel",)),
    )(x_cs, wqkv, bqkv, wout, bout)

    # Free view back to NCHW.
    return out_cs.reshape(B, C, H, W)


if __name__ == "__main__":
    key = jax.random.PRNGKey(0)
    kx, kw1, kb1, kw2, kb2 = jax.random.split(key, 5)

    # Small shapes consistent with the module (n_groups=32 default -> C=32); S = 256.
    B, C, H, W = 2, 32, 16, 16
    n_heads, d_k = 2, 16
    S = H * W

    x = jax.random.normal(kx, (B, C, H, W), jnp.float32)

    # nn.Linear default init bounds (uniform(-1/sqrt(fan_in), 1/sqrt(fan_in))).
    bound1 = 1.0 / (C ** 0.5)
    w_proj = jax.random.uniform(kw1, (3 * n_heads * d_k, C), jnp.float32, -bound1, bound1)
    b_proj = jax.random.uniform(kb1, (3 * n_heads * d_k,), jnp.float32, -bound1, bound1)
    bound2 = 1.0 / ((n_heads * d_k) ** 0.5)
    w_out = jax.random.uniform(kw2, (C, n_heads * d_k), jnp.float32, -bound2, bound2)
    b_out = jax.random.uniform(kb2, (C,), jnp.float32, -bound2, bound2)

    # Pure-JAX reference reproducing the PyTorch forward exactly.
    xs = x.reshape(B, C, S).transpose(0, 2, 1)                    # (B, S, C)
    qkv = (xs @ w_proj.T + b_proj).reshape(B, S, n_heads, 3 * d_k)
    q, k, v = qkv[..., :d_k], qkv[..., d_k:2 * d_k], qkv[..., 2 * d_k:]
    attn = jax.nn.softmax(jnp.einsum('bihd,bjhd->bijh', q, k) * (d_k ** -0.5), axis=2)
    res = jnp.einsum('bijh,bjhd->bihd', attn, v).reshape(B, S, n_heads * d_k)
    res = res @ w_out.T + b_out + xs
    ref = res.transpose(0, 2, 1).reshape(B, C, H, W)

    # 1) exact-math path (f32 matmuls, exact reciprocal): tight tolerance.
    out_f32 = jax.block_until_ready(attention_block(
        x, w_proj, b_proj, w_out, b_out, n_heads=n_heads, d_k=d_k,
        matmul_dtype=jnp.float32, approx_recip=False))
    assert out_f32.shape == (B, C, H, W), out_f32.shape
    err = float(jnp.max(jnp.abs(out_f32 - ref)))
    assert jnp.allclose(out_f32, ref, atol=1e-4, rtol=1e-4), err

    # 2) default fast path (bf16 MXU matmuls + f32 accumulation, approx reciprocal).
    out_fast = jax.block_until_ready(attention_block(
        x, w_proj, b_proj, w_out, b_out, n_heads=n_heads, d_k=d_k))
    err_fast = float(jnp.max(jnp.abs(out_fast - ref)))
    assert jnp.allclose(out_fast, ref, atol=5e-2, rtol=5e-2), err_fast

    print("KERNEL_OK")
</pallas_src>

<mosaic_0001>
module attributes {stable_mosaic.version = 11 : i64} {
  func.func @_attention_block_kernel(%arg0: i32, %arg1: memref<1x32x256xf32, #tpu.memory_space<vmem>>, %arg2: memref<96x32xf32, #tpu.memory_space<vmem>>, %arg3: memref<96x1xf32, #tpu.memory_space<vmem>>, %arg4: memref<32x32xf32, #tpu.memory_space<vmem>>, %arg5: memref<32x1xf32, #tpu.memory_space<vmem>>, %arg6: memref<1x32x256xf32, #tpu.memory_space<vmem>>) attributes {dimension_semantics = [#tpu.dimension_semantics<parallel>], iteration_bounds = array<i64: 2>, scalar_prefetch = 0 : i64, scratch_operands = 0 : i64, tpu.core_type = #tpu.core_type<tc>, window_params = [{transform_indices = @transform_0, window_bounds = array<i64: 1, 32, 256>}, {pipeline_mode = #tpu.pipeline_mode<synchronous>, transform_indices = @transform_1, window_bounds = array<i64: 96, 32>}, {pipeline_mode = #tpu.pipeline_mode<synchronous>, transform_indices = @transform_2, window_bounds = array<i64: 96, 1>}, {pipeline_mode = #tpu.pipeline_mode<synchronous>, transform_indices = @transform_3, window_bounds = array<i64: 32, 32>}, {pipeline_mode = #tpu.pipeline_mode<synchronous>, transform_indices = @transform_4, window_bounds = array<i64: 32, 1>}, {transform_indices = @transform_5, window_bounds = array<i64: 1, 32, 256>}]} {
    %c0 = arith.constant 0 : index
    %c0_0 = arith.constant 0 : index
    %c0_1 = arith.constant 0 : index
    %0 = vector.load %arg1[%c0, %c0_0, %c0_1] : memref<1x32x256xf32, #tpu.memory_space<vmem>>, vector<1x32x256xf32>
    %1 = vector.shape_cast %0 : vector<1x32x256xf32> to vector<32x256xf32>
    %c0_2 = arith.constant 0 : index
    %c0_3 = arith.constant 0 : index
    %2 = vector.load %arg2[%c0_2, %c0_3] : memref<96x32xf32, #tpu.memory_space<vmem>>, vector<96x32xf32>
    %cst = arith.constant dense<0.000000e+00> : vector<96x256xf32>
    %3 = tpu.matmul %2, %1, %cst {dimension_numbers = #tpu.dot_dimension_numbers<[1], [0], [0], [1], [0, 0, 1, 1], [], []>} : vector<96x32xf32>, vector<32x256xf32>, vector<96x256xf32> -> vector<96x256xf32>
    %c0_4 = arith.constant 0 : index
    %c0_5 = arith.constant 0 : index
    %4 = vector.load %arg3[%c0_4, %c0_5] : memref<96x1xf32, #tpu.memory_space<vmem>>, vector<96x1xf32>
    %5 = vector.broadcast %4 : vector<96x1xf32> to vector<96x256xf32>
    %6 = arith.addf %3, %5 : vector<96x256xf32>
    %7 = vector.shape_cast %6 : vector<96x256xf32> to vector<6x16x256xf32>
    %8 = vector.extract_strided_slice %7 {offsets = [0, 0, 0], sizes = [2, 16, 256], strides = [1, 1, 1]} : vector<6x16x256xf32> to vector<2x16x256xf32>
    %9 = vector.extract_strided_slice %7 {offsets = [2, 0, 0], sizes = [2, 16, 256], strides = [1, 1, 1]} : vector<6x16x256xf32> to vector<2x16x256xf32>
    %10 = vector.extract_strided_slice %7 {offsets = [4, 0, 0], sizes = [2, 16, 256], strides = [1, 1, 1]} : vector<6x16x256xf32> to vector<2x16x256xf32>
    %11 = tpu.transpose %8, [0, 2, 1] : vector<2x16x256xf32> -> vector<2x256x16xf32>
    %cst_6 = arith.constant dense<0.000000e+00> : vector<2x256x256xf32>
    %12 = tpu.matmul %11, %9, %cst_6 {dimension_numbers = #tpu.dot_dimension_numbers<[2], [1], [1], [2], [0, 0, 0, 1, 1, 2], [0], [0]>} : vector<2x256x16xf32>, vector<2x16x256xf32>, vector<2x256x256xf32> -> vector<2x256x256xf32>
    %cst_7 = arith.constant dense<0xFF800000> : vector<2x256xf32>
    %13 = vector.multi_reduction <maximumf>, %12, %cst_7 [2] : vector<2x256x256xf32> to vector<2x256xf32>
    %14 = vector.shape_cast %13 : vector<2x256xf32> to vector<2x256x1xf32>
    %15 = vector.broadcast %14 : vector<2x256x1xf32> to vector<2x256x256xf32>
    %16 = arith.subf %12, %15 : vector<2x256x256xf32>
    %17 = math.exp %16 : vector<2x256x256xf32>
    %cst_8 = arith.constant dense<0.000000e+00> : vector<2x256xf32>
    %18 = vector.multi_reduction <add>, %17, %cst_8 [2] : vector<2x256x256xf32> to vector<2x256xf32>
    %19 = vector.shape_cast %18 : vector<2x256xf32> to vector<2x256x1xf32>
    %20 = tpu.reciprocal %19 : vector<2x256x1xf32> -> vector<2x256x1xf32>
    %21 = vector.broadcast %20 : vector<2x256x1xf32> to vector<2x256x256xf32>
    %22 = arith.mulf %17, %21 : vector<2x256x256xf32>
    %cst_9 = arith.constant dense<0.000000e+00> : vector<2x16x256xf32>
    %23 = tpu.matmul %10, %22, %cst_9 {dimension_numbers = #tpu.dot_dimension_numbers<[2], [2], [1], [1], [0, 0, 0, 1, 1, 1], [0], [0]>} : vector<2x16x256xf32>, vector<2x256x256xf32>, vector<2x16x256xf32> -> vector<2x16x256xf32>
    %24 = vector.shape_cast %23 : vector<2x16x256xf32> to vector<32x256xf32>
    %c0_10 = arith.constant 0 : index
    %c0_11 = arith.constant 0 : index
    %25 = vector.load %arg4[%c0_10, %c0_11] : memref<32x32xf32, #tpu.memory_space<vmem>>, vector<32x32xf32>
    %cst_12 = arith.constant dense<0.000000e+00> : vector<32x256xf32>
    %26 = tpu.matmul %25, %24, %cst_12 {dimension_numbers = #tpu.dot_dimension_numbers<[1], [0], [0], [1], [0, 0, 1, 1], [], []>} : vector<32x32xf32>, vector<32x256xf32>, vector<32x256xf32> -> vector<32x256xf32>
    %c0_13 = arith.constant 0 : index
    %c0_14 = arith.constant 0 : index
    %27 = vector.load %arg5[%c0_13, %c0_14] : memref<32x1xf32, #tpu.memory_space<vmem>>, vector<32x1xf32>
    %28 = vector.broadcast %27 : vector<32x1xf32> to vector<32x256xf32>
    %29 = arith.addf %26, %28 : vector<32x256xf32>
    %30 = arith.addf %29, %1 : vector<32x256xf32>
    %c0_15 = arith.constant 0 : index
    %c0_16 = arith.constant 0 : index
    %c0_17 = arith.constant 0 : index
    %31 = vector.load %arg6[%c0_15, %c0_16, %c0_17] : memref<1x32x256xf32, #tpu.memory_space<vmem>>, vector<1x32x256xf32>
    %32 = vector.shape_cast %31 : vector<1x32x256xf32> to vector<32x256xf32>
    %33 = vector.shape_cast %30 : vector<32x256xf32> to vector<1x32x256xf32>
    tpu.vector_store %arg6[%c0_15, %c0_16, %c0_17], %33 {strides = array<i32>} : memref<1x32x256xf32, #tpu.memory_space<vmem>>, vector<1x32x256xf32>,
    return
  }
  func.func @transform_0(%arg0: i32) -> (i32, i32, i32) {
    %c0_i32 = arith.constant 0 : i32
    %c0_i32_0 = arith.constant 0 : i32
    %c0_i32_1 = arith.constant 0 : i32
    return %arg0, %c0_i32, %c0_i32_0 : i32, i32, i32
  }
  func.func @transform_1(%arg0: i32) -> (i32, i32) {
    %c0_i32 = arith.constant 0 : i32
    %c0_i32_0 = arith.constant 0 : i32
    %c0_i32_1 = arith.constant 0 : i32
    return %c0_i32, %c0_i32_0 : i32, i32
  }
  func.func @transform_2(%arg0: i32) -> (i32, i32) {
    %c0_i32 = arith.constant 0 : i32
    %c0_i32_0 = arith.constant 0 : i32
    %c0_i32_1 = arith.constant 0 : i32
    return %c0_i32, %c0_i32_0 : i32, i32
  }
  func.func @transform_3(%arg0: i32) -> (i32, i32) {
    %c0_i32 = arith.constant 0 : i32
    %c0_i32_0 = arith.constant 0 : i32
    %c0_i32_1 = arith.constant 0 : i32
    return %c0_i32, %c0_i32_0 : i32, i32
  }
  func.func @transform_4(%arg0: i32) -> (i32, i32) {
    %c0_i32 = arith.constant 0 : i32
    %c0_i32_0 = arith.constant 0 : i32
    %c0_i32_1 = arith.constant 0 : i32
    return %c0_i32, %c0_i32_0 : i32, i32
  }
  func.func @transform_5(%arg0: i32) -> (i32, i32, i32) {
    %c0_i32 = arith.constant 0 : i32
    %c0_i32_0 = arith.constant 0 : i32
    %c0_i32_1 = arith.constant 0 : i32
    return %arg0, %c0_i32, %c0_i32_0 : i32, i32, i32
  }
}

</mosaic_0001>

<llo_original>
// kernel: tpu_custom_call.1
$region0: #{tpu_custom_call.1}
  #allocation0 [shape = 'u32[]', space=smem, size = 0x4, offset = 0x4, fixed_abs, tag = 'smem constant byte address 0x4 - core index']
  #allocation1 [shape = 'u32[144,128]{1,0:T(1,128)}', space=vmem, size = 0x12000, scoped, tag = 'internal scratch']
  %s0 = inlined_call_operand.vmem [shape: f32[2,32,256], index: 0, kind: input, shape index: {}]
  %s1 = inlined_call_operand.vmem [shape: f32[96,32], index: 1, kind: input, shape index: {}]
  %s2 = inlined_call_operand.vmem [shape: f32[96,1], index: 2, kind: input, shape index: {}]
  %s3 = inlined_call_operand.vmem [shape: f32[32,32], index: 3, kind: input, shape index: {}]
  %s4 = inlined_call_operand.vmem [shape: f32[32,1], index: 4, kind: input, shape index: {}]
  %s5 = inlined_call_operand.hbm [shape: f32[2,32,256], index: 5, kind: output, shape index: {}]
  %s6 = sld [smem:[#allocation0]]
  $region53: #{tpu_custom_call.1} parent=0
    _
  %s8 = ssub.s32 1, %s6
  %s9 = scalar_select 0, %s8, %s6
  $region1: #{tpu_custom_call.1} parent=0
    #allocation2 [shape = 'u8[65536]{0}', space=vmem, size = 0x10000, scoped, tag = 'output window, operand 0']
    #allocation3 [shape = 's32[2]{0}', space=sflag, size = 0x8, scoped, tag = 'scoped memory for tpu_custom_call.1']
    %10 = vsyncpa [#allocation3], 0
    %s11 = scalar_lea.sflag [#allocation3], 1
    %12 = vsyncpa %s11, 0
    loop: start=0, step=1, limit=4
    $region2: #{tpu_custom_call.1} parent=1 // loop_pre_header
      _
    $region3: #{tpu_custom_call.1} parent=1 // loop_header
      %s14 = sphi 0, %s18
      %p15 = scmp.ge.s32.totalorder %s14, 4
      %s24 = sphi 0, %s26
      %s27 = sphi 0, %s24
      %s28 = sphi 0, %s27
      %s44 = sphi 0, %s28
      %s48 = sphi 0, %s48
      %s50 = sphi 0, %s48
      %s51 = sphi 0, %s50
      %s65 = sphi 0, %s51
      %s69 = sphi 0, %s69
      %s71 = sphi 0, %s69
      %s72 = sphi 0, %s71
      %s86 = sphi 0, %s72
      %s90 = sphi 0, %s90
      %s92 = sphi 0, %s90
      %s93 = sphi 0, %s92
      %s107 = sphi 0, %s93
      %s111 = sphi 0, %s111
      %s113 = sphi 0, %s111
      %s114 = sphi 0, %s113
      %s128 = sphi 0, %s114
      %s134 = sphi 0, %s136
      %s137 = sphi 0, %s134
      %s138 = sphi 0, %s137
      %s154 = sphi 0, %s138
    $region4: #{tpu_custom_call.1} parent=1 // loop_header_branch
      %17 = sbr.rel (%p15) target = $region8
    $region5: #{tpu_custom_call.1} parent=1 // loop_body
      %s19 = ssub.s32 %s14, 1
      %s20 = ssub.s32 %s14, 2
      %s21 = sadd.s32 %s14, 1
      %s22 = ssub.s32 %s14, %s21
      %p23 = scmp.eq.s32.totalorder %s22, 0
      %s25 = sadd.s32 %s24, 1
      %s26 = scalar_select %p23, %s24, %s25
      %p29 = pneg %p23
      %p30 = scmp.eq.s32.totalorder %s14, 1
      %p31 = por %p29, %p30
      %p32 = scmp.ne.s32.totalorder %s24, %s27
      %p33 = scmp.eq.s32.totalorder %s14, 0
      %p34 = por %p32, %p33
      %p35 = scmp.ne.s32.totalorder %s24, %s27
      %p36 = scmp.eq.s32.totalorder %s19, 1
      %p37 = por %p35, %p36
      %p38 = scmp.ne.s32.totalorder %s27, %s28
      %p39 = scmp.eq.s32.totalorder %s19, 0
      %p40 = por %p38, %p39
      %p41 = scmp.ne.s32.totalorder %s27, %s28
      %p42 = scmp.eq.s32.totalorder %s20, 1
      %p43 = por %p41, %p42
      %p45 = scmp.ne.s32.totalorder %s28, %s44
      %p46 = scmp.eq.s32.totalorder %s20, 0
      %p47 = por %p45, %p46
      %s49 = sadd.s32 %s48, 1
      %p52 = scmp.eq.s32.totalorder %s14, 1
      %p53 = scmp.ne.s32.totalorder %s48, %s50
      %p54 = scmp.eq.s32.totalorder %s14, 0
      %p55 = por %p53, %p54
      %p56 = scmp.ne.s32.totalorder %s48, %s50
      %p57 = scmp.eq.s32.totalorder %s19, 1
      %p58 = por %p56, %p57
      %p59 = scmp.ne.s32.totalorder %s50, %s51
      %p60 = scmp.eq.s32.totalorder %s19, 0
      %p61 = por %p59, %p60
      %p62 = scmp.ne.s32.totalorder %s50, %s51
      %p63 = scmp.eq.s32.totalorder %s20, 1
      %p64 = por %p62, %p63
      %p66 = scmp.ne.s32.totalorder %s51, %s65
      %p67 = scmp.eq.s32.totalorder %s20, 0
      %p68 = por %p66, %p67
      %s70 = sadd.s32 %s69, 1
      %p73 = scmp.eq.s32.totalorder %s14, 1
      %p74 = scmp.ne.s32.totalorder %s69, %s71
      %p75 = scmp.eq.s32.totalorder %s14, 0
      %p76 = por %p74, %p75
      %p77 = scmp.ne.s32.totalorder %s69, %s71
      %p78 = scmp.eq.s32.totalorder %s19, 1
      %p79 = por %p77, %p78
      %p80 = scmp.ne.s32.totalorder %s71, %s72
      %p81 = scmp.eq.s32.totalorder %s19, 0
      %p82 = por %p80, %p81
      %p83 = scmp.ne.s32.totalorder %s71, %s72
      %p84 = scmp.eq.s32.totalorder %s20, 1
      %p85 = por %p83, %p84
      %p87 = scmp.ne.s32.totalorder %s72, %s86
      %p88 = scmp.eq.s32.totalorder %s20, 0
      %p89 = por %p87, %p88
      %s91 = sadd.s32 %s90, 1
      %p94 = scmp.eq.s32.totalorder %s14, 1
      %p95 = scmp.ne.s32.totalorder %s90, %s92
      %p96 = scmp.eq.s32.totalorder %s14, 0
      %p97 = por %p95, %p96
      %p98 = scmp.ne.s32.totalorder %s90, %s92
      %p99 = scmp.eq.s32.totalorder %s19, 1
      %p100 = por %p98, %p99
      %p101 = scmp.ne.s32.totalorder %s92, %s93
      %p102 = scmp.eq.s32.totalorder %s19, 0
      %p103 = por %p101, %p102
      %p104 = scmp.ne.s32.totalorder %s92, %s93
      %p105 = scmp.eq.s32.totalorder %s20, 1
      %p106 = por %p104, %p105
      %p108 = scmp.ne.s32.totalorder %s93, %s107
      %p109 = scmp.eq.s32.totalorder %s20, 0
      %p110 = por %p108, %p109
      %s112 = sadd.s32 %s111, 1
      %p115 = scmp.eq.s32.totalorder %s14, 1
      %p116 = scmp.ne.s32.totalorder %s111, %s113
      %p117 = scmp.eq.s32.totalorder %s14, 0
      %p118 = por %p116, %p117
      %p119 = scmp.ne.s32.totalorder %s111, %s113
      %p120 = scmp.eq.s32.totalorder %s19, 1
      %p121 = por %p119, %p120
      %p122 = scmp.ne.s32.totalorder %s113, %s114
      %p123 = scmp.eq.s32.totalorder %s19, 0
      %p124 = por %p122, %p123
      %p125 = scmp.ne.s32.totalorder %s113, %s114
      %p126 = scmp.eq.s32.totalorder %s20, 1
      %p127 = por %p125, %p126
      %p129 = scmp.ne.s32.totalorder %s114, %s128
      %p130 = scmp.eq.s32.totalorder %s20, 0
      %p131 = por %p129, %p130
      %s132 = ssub.s32 %s14, %s21
      %p133 = scmp.eq.s32.totalorder %s132, 0
      %s135 = sadd.s32 %s134, 1
      %s136 = scalar_select %p133, %s134, %s135
      %p139 = pneg %p133
      %p140 = scmp.eq.s32.totalorder %s14, 1
      %p141 = por %p139, %p140
      %p142 = scmp.ne.s32.totalorder %s134, %s137
      %p143 = scmp.eq.s32.totalorder %s14, 0
      %p144 = por %p142, %p143
      %p145 = scmp.ne.s32.totalorder %s134, %s137
      %p146 = scmp.eq.s32.totalorder %s19, 1
      %p147 = por %p145, %p146
      %p148 = scmp.ne.s32.totalorder %s137, %s138
      %p149 = scmp.eq.s32.totalorder %s19, 0
      %p150 = por %p148, %p149
      %p151 = scmp.ne.s32.totalorder %s137, %s138
      %p152 = scmp.eq.s32.totalorder %s20, 1
      %p153 = por %p151, %p152
      %p155 = scmp.ne.s32.totalorder %s138, %s154
      %p156 = scmp.eq.s32.totalorder %s20, 0
      %p157 = por %p155, %p156
      %p158 = scmp.le.s32.totalorder 1, %s14
      %p159 = scmp.lt.s32.totalorder %s14, 3
      %p160 = pnand %p158, %p159
      %p161 = pneg %p160
      // Predicated region
      $region9: #{tpu_custom_call.1} parent=5 // pred_check
        _
      $region10: #{tpu_custom_call.1} parent=5 // pred_check_branch
        %163 = sbr.rel (%p160) target = $region12
      $region11: #{tpu_custom_call.1} parent=5 // pred_region
        %s164 = ssub.s32 %s14, 1
        // Predicated region
        $region13: #{tpu_custom_call.1} parent=11 // pred_check
          %p165 = pneg %p61
        $region14: #{tpu_custom_call.1} parent=11 // pred_check_branch
          %167 = sbr.rel (%p165) target = $region16
        $region15: #{tpu_custom_call.1} parent=11 // pred_region
          _
        $region16: #{tpu_custom_call.1} parent=11 // pred_fallthru
          _
        // Predicated region
        $region17: #{tpu_custom_call.1} parent=11 // pred_check
          %p168 = pneg %p82
        $region18: #{tpu_custom_call.1} parent=11 // pred_check_branch
          %170 = sbr.rel (%p168) target = $region20
        $region19: #{tpu_custom_call.1} parent=11 // pred_region
          _
        $region20: #{tpu_custom_call.1} parent=11 // pred_fallthru
          _
        // Predicated region
        $region21: #{tpu_custom_call.1} parent=11 // pred_check
          %p171 = pneg %p103
        $region22: #{tpu_custom_call.1} parent=11 // pred_check_branch
          %173 = sbr.rel (%p171) target = $region24
        $region23: #{tpu_custom_call.1} parent=11 // pred_region
          _
        $region24: #{tpu_custom_call.1} parent=11 // pred_fallthru
          _
        // Predicated region
        $region25: #{tpu_custom_call.1} parent=11 // pred_check
          %p174 = pneg %p124
        $region26: #{tpu_custom_call.1} parent=11 // pred_check_branch
          %176 = sbr.rel (%p174) target = $region28
        $region27: #{tpu_custom_call.1} parent=11 // pred_region
          _
        $region28: #{tpu_custom_call.1} parent=11 // pred_fallthru
          _
      $region12: #{tpu_custom_call.1} parent=5 // pred_fallthru
        _
      %p177 = scmp.lt.s32.totalorder %s14, 2
      // Predicated region
      $region29: #{tpu_custom_call.1} parent=5 // pred_check
        %p178 = pneg %p177
      $region30: #{tpu_custom_call.1} parent=5 // pred_check_branch
        %180 = sbr.rel (%p178) target = $region32
      $region31: #{tpu_custom_call.1} parent=5 // pred_region
        // Predicated region
        $region33: #{tpu_custom_call.1} parent=31 // pred_check
          %p181 = pneg %p34
        $region34: #{tpu_custom_call.1} parent=31 // pred_check_branch
          %183 = sbr.rel (%p181) target = $region36
        $region35: #{tpu_custom_call.1} parent=31 // pred_region
          %p184 = scmp.lt.s32.totalorder %s14, 1
          %s185 = scalar_select %p184, %s14, 1
          %s186 = smul.addr %s185, 8
          %s187 = smul.addr %s186, 8
          %s188 = scalar_lea.vmem %s0, %s187
        $region36: #{tpu_custom_call.1} parent=31 // pred_fallthru
          _
      $region32: #{tpu_custom_call.1} parent=5 // pred_fallthru
        _
      %p189 = scmp.le.s32.totalorder 1, %s14
      %p190 = scmp.lt.s32.totalorder %s14, 3
      %p191 = pnand %p189, %p190
      %p192 = pneg %p191
      // Predicated region
      $region37: #{tpu_custom_call.1} parent=5 // pred_check
        _
      $region38: #{tpu_custom_call.1} parent=5 // pred_check_branch
        %194 = sbr.rel (%p191) target = $region40
      $region39: #{tpu_custom_call.1} parent=5 // pred_region
        %s195 = ssub.s32 %s14, 1
        %p196 = scmp.lt.s32.totalorder %s19, 1
        %s197 = scalar_select %p196, %s19, 1
        %s198 = smul.addr %s197, 8
        %s199 = smul.addr %s198, 8
        %s200 = scalar_lea.vmem %s0, %s199
        %p201 = pneg %p40
        %p202 = pneg %p37
        %p203 = pneg %p61
        %p204 = pneg %p58
        %p205 = pneg %p82
        %p206 = pneg %p79
        %p207 = pneg %p103
        %p208 = pneg %p100
        %p209 = pneg %p124
        %p210 = pneg %p121
        %p211 = pneg %p150
        %p212 = pneg %p147
        %s213 = sand.u32 %s137, 1
        %s214 = scalar_lea.sflag [#allocation3], %s213
        %s215 = sand.u32 %s137, 1
        %s216 = smul.addr %s215, 64
        %s217 = scalar_lea.vmem [#allocation2], %s216
        %p218 = scmp.lt.s32.totalorder %s19, 1
        %s219 = scalar_select %p218, %s19, 1
        %s220 = smul.addr %s219, 8
        %s221 = smul.addr %s220, 8
        %s222 = scalar_lea.vmem %s0, %s221
        %v223 = vld [vmem:[%s222] sm:$0xff]
        %v224 = vld [vmem:[%s222 + $0x8] sm:$0xff]
        %v225 = vld [vmem:[%s222 + $0x10] sm:$0xff]
        %v226 = vld [vmem:[%s222 + $0x18] sm:$0xff]
        %v227 = vld [vmem:[%s222 + $0x20] sm:$0xff]
        %v228 = vld [vmem:[%s222 + $0x28] sm:$0xff]
        %v229 = vld [vmem:[%s222 + $0x30] sm:$0xff]
        %v230 = vld [vmem:[%s222 + $0x38] sm:$0xff]
        %v231 = vld [vmem:[%s1] sm:$0xff]
        %v232 = vld [vmem:[%s1 + $0x8] sm:$0xff]
        %v233 = vld [vmem:[%s1 + $0x10] sm:$0xff]
        %v234 = vld [vmem:[%s1 + $0x18] sm:$0xff]
        %v235 = vld [vmem:[%s1 + $0x20] sm:$0xff]
        %v236 = vld [vmem:[%s1 + $0x28] sm:$0xff]
        %v237 = vld [vmem:[%s1 + $0x30] sm:$0xff]
        %v238 = vld [vmem:[%s1 + $0x38] sm:$0xff]
        %v239 = vld [vmem:[%s1 + $0x40] sm:$0xff]
        %v240 = vld [vmem:[%s1 + $0x48] sm:$0xff]
        %v241 = vld [vmem:[%s1 + $0x50] sm:$0xff]
        %v242 = vld [vmem:[%s1 + $0x58] sm:$0xff]
        %v243 = vld [vmem:[%s2] sm:$0xff]
        %v244 = vld [vmem:[%s2 + $0x8] sm:$0xff]
        %v245 = vld [vmem:[%s2 + $0x10] sm:$0xff]
        %v246 = vld [vmem:[%s2 + $0x18] sm:$0xff]
        %v247 = vld [vmem:[%s2 + $0x20] sm:$0xff]
        %v248 = vld [vmem:[%s2 + $0x28] sm:$0xff]
        %v249 = vld [vmem:[%s2 + $0x30] sm:$0xff]
        %v250 = vld [vmem:[%s2 + $0x38] sm:$0xff]
        %v251 = vld [vmem:[%s2 + $0x40] sm:$0xff]
        %v252 = vld [vmem:[%s2 + $0x48] sm:$0xff]
        %v253 = vld [vmem:[%s2 + $0x50] sm:$0xff]
        %v254 = vld [vmem:[%s2 + $0x58] sm:$0xff]
        %256 = vset.pattern.permute.xlu0 0
        %257 = vperm.xlu0 %256, %v243
        %v258 = vpop.permute.xlu0 %257
        %261 = vset.pattern.permute.xlu0 0
        %262 = vperm.xlu0 %261, %v244
        %v263 = vpop.permute.xlu0 %262
        %266 = vset.pattern.permute.xlu0 0
        %267 = vperm.xlu0 %266, %v245
        %v268 = vpop.permute.xlu0 %267
        %271 = vset.pattern.permute.xlu0 0
        %272 = vperm.xlu0 %271, %v246
        %v273 = vpop.permute.xlu0 %272
        %276 = vset.pattern.permute.xlu0 0
        %277 = vperm.xlu0 %276, %v247
        %v278 = vpop.permute.xlu0 %277
        %281 = vset.pattern.permute.xlu0 0
        %282 = vperm.xlu0 %281, %v248
        %v283 = vpop.permute.xlu0 %282
        %286 = vset.pattern.permute.xlu0 0
        %287 = vperm.xlu0 %286, %v249
        %v288 = vpop.permute.xlu0 %287
        %291 = vset.pattern.permute.xlu0 0
        %292 = vperm.xlu0 %291, %v250
        %v293 = vpop.permute.xlu0 %292
        %296 = vset.pattern.permute.xlu0 0
        %297 = vperm.xlu0 %296, %v251
        %v298 = vpop.permute.xlu0 %297
        %301 = vset.pattern.permute.xlu0 0
        %302 = vperm.xlu0 %301, %v252
        %v303 = vpop.permute.xlu0 %302
        %306 = vset.pattern.permute.xlu0 0
        %307 = vperm.xlu0 %306, %v253
        %v308 = vpop.permute.xlu0 %307
        %311 = vset.pattern.permute.xlu0 0
        %312 = vperm.xlu0 %311, %v254
        %v313 = vpop.permute.xlu0 %312
        %vm315 = vcmask 261120
        %v317 = vsel %vm315, %v231, 0
        %v320 = vsel %vm315, %v232, 0
        %v323 = vsel %vm315, %v233, 0
        %v326 = vsel %vm315, %v234, 0
        %v329 = vsel %vm315, %v235, 0
        %v332 = vsel %vm315, %v236, 0
        %v335 = vsel %vm315, %v237, 0
        %v338 = vsel %vm315, %v238, 0
        %v341 = vsel %vm315, %v239, 0
        %v344 = vsel %vm315, %v240, 0
        %v347 = vsel %vm315, %v241, 0
        %v350 = vsel %vm315, %v242, 0
        %352 = vmatprep.subr.mxu0 0.0
        %353 = vmatpush1.msra.mxu0 0.0
        %354 = vmatprep.subr.mxu0 0.0
        %355 = vmatpush1.msra.mxu0 0.0
        %356 = vmatprep.subr.mxu0 0.0
        %357 = vmatpush1.msra.mxu0 0.0
        %358 = vmatprep.subr.mxu0 0.0
        %359 = vmatpush1.msra.mxu0 0.0
        %360 = vmatprep.subr.mxu0 0.0
        %361 = vmatpush1.msra.mxu0 0.0
        %362 = vmatprep.subr.mxu0 0.0
        %363 = vmatpush1.msra.mxu0 0.0
        %364 = vmatprep.subr.mxu0 0.0
        %365 = vmatpush1.msra.mxu0 0.0
        %366 = vmatprep.subr.mxu0 0.0
        %367 = vmatpush1.msra.mxu0 0.0
        %368 = vmatprep.subr.mxu0 0.0
        %369 = vmatpush1.msra.mxu0 0.0
        %370 = vmatprep.subr.mxu0 0.0
        %371 = vmatpush1.msra.mxu0 0.0
        %372 = vmatprep.subr.mxu0 0.0
        %373 = vmatpush1.msra.mxu0 0.0
        %374 = vmatprep.subr.mxu0 0.0
        %375 = vmatpush1.msra.mxu0 0.0
        %376 = vmatprep.subr.mxu0 %v230
        %377 = vmatpush1.msra.mxu0 %v229
        %378 = vmatprep.subr.mxu0 %v228
        %379 = vmatpush1.msra.mxu0 %v227
        %380 = vmatprep.subr.mxu0 %v226
        %381 = vmatpush1.msra.mxu0 %v225
        %382 = vmatprep.subr.mxu0 %v224
        %383 = vmatpush1.msra.mxu0 %v223
        %384 = vmatprep.subr.mxu0 0.0
        %385 = vmatpush2.msra.mxu0 0.0
        %386 = vmatprep.subr.mxu0 0.0
        %387 = vmatpush2.msra.mxu0 0.0
        %388 = vmatprep.subr.mxu0 0.0
        %389 = vmatpush2.msra.mxu0 0.0
        %390 = vmatprep.subr.mxu0 0.0
        %391 = vmatpush2.msra.mxu0 0.0
        %392 = vmatprep.subr.mxu0 0.0
        %393 = vmatpush2.msra.mxu0 0.0
        %394 = vmatprep.subr.mxu0 0.0
        %395 = vmatpush2.msra.mxu0 0.0
        %396 = vmatprep.subr.mxu0 0.0
        %397 = vmatpush2.msra.mxu0 0.0
        %398 = vmatprep.subr.mxu0 0.0
        %399 = vmatpush2.msra.mxu0 0.0
        %400 = vmatprep.subr.mxu0 0.0
        %401 = vmatpush2.msra.mxu0 0.0
        %402 = vmatprep.subr.mxu0 0.0
        %403 = vmatpush2.msra.mxu0 0.0
        %404 = vmatprep.subr.mxu0 0.0
        %405 = vmatpush2.msra.mxu0 0.0
        %406 = vmatprep.subr.mxu0 0.0
        %407 = vmatpush2.msra.mxu0 0.0
        %408 = vmatprep.subr.mxu0 0.0
        %409 = vmatpush2.msra.mxu0 0.0
        %410 = vmatprep.subr.mxu0 0.0
        %411 = vmatpush2.msra.mxu0 0.0
        %412 = vmatprep.subr.mxu0 0.0
        %413 = vmatpush2.msra.mxu0 0.0
        %414 = vmatprep.subr.mxu0 0.0
        %415 = vmatpush2.msra.mxu0 0.0
        %416 = vmatprep.mubr.f32.mxu0 0.0
        %417 = vmatmul.mubr.f32.gmra.mxu0 %v317
        %v418 = vpop.f32.mrf.mxu0
        %v419 = vadd.f32 %v258, %v418
        %v420 = vpop.f32.mrf.mxu0
        %v421 = vadd.f32 %v258, %v420
        %422 = vmatprep.mubr.f32.mxu0 0.0
        %423 = vmatmul.mubr.f32.gmra.mxu0 %v320
        %v424 = vpop.f32.mrf.mxu0
        %v425 = vadd.f32 %v263, %v424
        %v426 = vpop.f32.mrf.mxu0
        %v427 = vadd.f32 %v263, %v426
        %428 = vmatprep.mubr.f32.mxu0 0.0
        %429 = vmatmul.mubr.f32.gmra.mxu0 %v323
        %v430 = vpop.f32.mrf.mxu0
        %v431 = vadd.f32 %v268, %v430
        %v432 = vpop.f32.mrf.mxu0
        %v433 = vadd.f32 %v268, %v432
        %434 = vmatprep.mubr.f32.mxu0 0.0
        %435 = vmatmul.mubr.f32.gmra.mxu0 %v326
        %v436 = vpop.f32.mrf.mxu0
        %v437 = vadd.f32 %v273, %v436
        %v438 = vpop.f32.mrf.mxu0
        %v439 = vadd.f32 %v273, %v438
        %440 = vmatprep.mubr.f32.mxu0 0.0
        %441 = vmatmul.mubr.f32.gmra.mxu0 %v329
        %v442 = vpop.f32.mrf.mxu0
        %v443 = vadd.f32 %v278, %v442
        %v444 = vpop.f32.mrf.mxu0
        %v445 = vadd.f32 %v278, %v444
        %446 = vmatprep.mubr.f32.mxu0 0.0
        %447 = vmatmul.mubr.f32.gmra.mxu0 %v332
        %v448 = vpop.f32.mrf.mxu0
        %v449 = vadd.f32 %v283, %v448
        %v450 = vpop.f32.mrf.mxu0
        %v451 = vadd.f32 %v283, %v450
        %452 = vmatprep.mubr.f32.mxu0 0.0
        %453 = vmatmul.mubr.f32.gmra.mxu0 %v335
        %v454 = vpop.f32.mrf.mxu0
        %v455 = vadd.f32 %v288, %v454
        %v456 = vpop.f32.mrf.mxu0
        %v457 = vadd.f32 %v288, %v456
        %458 = vmatprep.mubr.f32.mxu0 0.0
        %459 = vmatmul.mubr.f32.gmra.mxu0 %v338
        %v460 = vpop.f32.mrf.mxu0
        %v461 = vadd.f32 %v293, %v460
        %v462 = vpop.f32.mrf.mxu0
        %v463 = vadd.f32 %v293, %v462
        %464 = vmatprep.mubr.f32.mxu0 0.0
        %465 = vmatmul.mubr.f32.gmra.mxu0 %v341
        %v466 = vpop.f32.mrf.mxu0
        %v467 = vadd.f32 %v298, %v466
        %v468 = vpop.f32.mrf.mxu0
        %v469 = vadd.f32 %v298, %v468
        %470 = vmatprep.mubr.f32.mxu0 0.0
        %471 = vmatmul.mubr.f32.gmra.mxu0 %v344
        %v472 = vpop.f32.mrf.mxu0
        %v473 = vadd.f32 %v303, %v472
        %v474 = vpop.f32.mrf.mxu0
        %v475 = vadd.f32 %v303, %v474
        %476 = vmatprep.mubr.f32.mxu0 0.0
        %477 = vmatmul.mubr.f32.gmra.mxu0 %v347
        %v478 = vpop.f32.mrf.mxu0
        %v479 = vadd.f32 %v308, %v478
        %v480 = vpop.f32.mrf.mxu0
        %v481 = vadd.f32 %v308, %v480
        %482 = vmatprep.mubr.f32.mxu0 0.0
        %483 = vmatmul.mubr.f32.gmra.mxu0 %v350
        %v484 = vpop.f32.mrf.mxu0
        %v485 = vadd.f32 %v313, %v484
        %v486 = vpop.f32.mrf.mxu0
        %v487 = vadd.f32 %v313, %v486
        %488 = vdwg.mxu0
        %489 = vxpose.xlu0.b32.start [1/16] %v419, 128
        %490 = vxpose.xlu0.b32.cont [2/16] %v425, 128
        %491 = vxpose.xlu0.b32.cont [3/16] 0.0, 128
        %492 = vxpose.xlu0.b32.cont [4/16] 0.0, 128
        %493 = vxpose.xlu0.b32.cont [5/16] 0.0, 128
        %494 = vxpose.xlu0.b32.cont [6/16] 0.0, 128
        %495 = vxpose.xlu0.b32.cont [7/16] 0.0, 128
        %496 = vxpose.xlu0.b32.cont [8/16] 0.0, 128
        %497 = vxpose.xlu0.b32.cont [9/16] 0.0, 128
        %498 = vxpose.xlu0.b32.cont [10/16] 0.0, 128
        %499 = vxpose.xlu0.b32.cont [11/16] 0.0, 128
        %500 = vxpose.xlu0.b32.cont [12/16] 0.0, 128
        %501 = vxpose.xlu0.b32.cont [13/16] 0.0, 128
        %502 = vxpose.xlu0.b32.cont [14/16] 0.0, 128
        %503 = vxpose.xlu0.b32.cont [15/16] 0.0, 128
        %504 = vxpose.xlu0.b32.end [16/16] 0.0, 128
        %v505 = vpop.trf.xlu0
        %v506 = vpop.trf.xlu0
        %v507 = vpop.trf.xlu0
        %v508 = vpop.trf.xlu0
        %v509 = vpop.trf.xlu0
        %v510 = vpop.trf.xlu0
        %v511 = vpop.trf.xlu0
        %v512 = vpop.trf.xlu0
        %v513 = vpop.trf.xlu0
        %v514 = vpop.trf.xlu0
        %v515 = vpop.trf.xlu0
        %v516 = vpop.trf.xlu0
        %v517 = vpop.trf.xlu0
        %v518 = vpop.trf.xlu0
        %v519 = vpop.trf.xlu0
        %v520 = vpop.trf.xlu0
        %521 = vxpose.xlu0.b32.start [1/16] %v421, 128
        %522 = vxpose.xlu0.b32.cont [2/16] %v427, 128
        %523 = vxpose.xlu0.b32.cont [3/16] 0.0, 128
        %524 = vxpose.xlu0.b32.cont [4/16] 0.0, 128
        %525 = vxpose.xlu0.b32.cont [5/16] 0.0, 128
        %526 = vxpose.xlu0.b32.cont [6/16] 0.0, 128
        %527 = vxpose.xlu0.b32.cont [7/16] 0.0, 128
        %528 = vxpose.xlu0.b32.cont [8/16] 0.0, 128
        %529 = vxpose.xlu0.b32.cont [9/16] 0.0, 128
        %530 = vxpose.xlu0.b32.cont [10/16] 0.0, 128
        %531 = vxpose.xlu0.b32.cont [11/16] 0.0, 128
        %532 = vxpose.xlu0.b32.cont [12/16] 0.0, 128
        %533 = vxpose.xlu0.b32.cont [13/16] 0.0, 128
        %534 = vxpose.xlu0.b32.cont [14/16] 0.0, 128
        %535 = vxpose.xlu0.b32.cont [15/16] 0.0, 128
        %536 = vxpose.xlu0.b32.end [16/16] 0.0, 128
        %v537 = vpop.trf.xlu0
        %v538 = vpop.trf.xlu0
        %v539 = vpop.trf.xlu0
        %v540 = vpop.trf.xlu0
        %v541 = vpop.trf.xlu0
        %v542 = vpop.trf.xlu0
        %v543 = vpop.trf.xlu0
        %v544 = vpop.trf.xlu0
        %v545 = vpop.trf.xlu0
        %v546 = vpop.trf.xlu0
        %v547 = vpop.trf.xlu0
        %v548 = vpop.trf.xlu0
        %v549 = vpop.trf.xlu0
        %v550 = vpop.trf.xlu0
        %v551 = vpop.trf.xlu0
        %v552 = vpop.trf.xlu0
        %553 = vxpose.xlu0.b32.start [1/16] %v431, 128
        %554 = vxpose.xlu0.b32.cont [2/16] %v437, 128
        %555 = vxpose.xlu0.b32.cont [3/16] 0.0, 128
        %556 = vxpose.xlu0.b32.cont [4/16] 0.0, 128
        %557 = vxpose.xlu0.b32.cont [5/16] 0.0, 128
        %558 = vxpose.xlu0.b32.cont [6/16] 0.0, 128
        %559 = vxpose.xlu0.b32.cont [7/16] 0.0, 128
        %560 = vxpose.xlu0.b32.cont [8/16] 0.0, 128
        %561 = vxpose.xlu0.b32.cont [9/16] 0.0, 128
        %562 = vxpose.xlu0.b32.cont [10/16] 0.0, 128
        %563 = vxpose.xlu0.b32.cont [11/16] 0.0, 128
        %564 = vxpose.xlu0.b32.cont [12/16] 0.0, 128
        %565 = vxpose.xlu0.b32.cont [13/16] 0.0, 128
        %566 = vxpose.xlu0.b32.cont [14/16] 0.0, 128
        %567 = vxpose.xlu0.b32.cont [15/16] 0.0, 128
        %568 = vxpose.xlu0.b32.end [16/16] 0.0, 128
        %v569 = vpop.trf.xlu0
        %v570 = vpop.trf.xlu0
        %v571 = vpop.trf.xlu0
        %v572 = vpop.trf.xlu0
        %v573 = vpop.trf.xlu0
        %v574 = vpop.trf.xlu0
        %v575 = vpop.trf.xlu0
        %v576 = vpop.trf.xlu0
        %v577 = vpop.trf.xlu0
        %v578 = vpop.trf.xlu0
        %v579 = vpop.trf.xlu0
        %v580 = vpop.trf.xlu0
        %v581 = vpop.trf.xlu0
        %v582 = vpop.trf.xlu0
        %v583 = vpop.trf.xlu0
        %v584 = vpop.trf.xlu0
        %585 = vxpose.xlu0.b32.start [1/16] %v433, 128
        %586 = vxpose.xlu0.b32.cont [2/16] %v439, 128
        %587 = vxpose.xlu0.b32.cont [3/16] 0.0, 128
        %588 = vxpose.xlu0.b32.cont [4/16] 0.0, 128
        %589 = vxpose.xlu0.b32.cont [5/16] 0.0, 128
        %590 = vxpose.xlu0.b32.cont [6/16] 0.0, 128
        %591 = vxpose.xlu0.b32.cont [7/16] 0.0, 128
        %592 = vxpose.xlu0.b32.cont [8/16] 0.0, 128
        %593 = vxpose.xlu0.b32.cont [9/16] 0.0, 128
        %594 = vxpose.xlu0.b32.cont [10/16] 0.0, 128
        %595 = vxpose.xlu0.b32.cont [11/16] 0.0, 128
        %596 = vxpose.xlu0.b32.cont [12/16] 0.0, 128
        %597 = vxpose.xlu0.b32.cont [13/16] 0.0, 128
        %598 = vxpose.xlu0.b32.cont [14/16] 0.0, 128
        %599 = vxpose.xlu0.b32.cont [15/16] 0.0, 128
        %600 = vxpose.xlu0.b32.end [16/16] 0.0, 128
        %v601 = vpop.trf.xlu0
        %v602 = vpop.trf.xlu0
        %v603 = vpop.trf.xlu0
        %v604 = vpop.trf.xlu0
        %v605 = vpop.trf.xlu0
        %v606 = vpop.trf.xlu0
        %v607 = vpop.trf.xlu0
        %v608 = vpop.trf.xlu0
        %v609 = vpop.trf.xlu0
        %v610 = vpop.trf.xlu0
        %v611 = vpop.trf.xlu0
        %v612 = vpop.trf.xlu0
        %v613 = vpop.trf.xlu0
        %v614 = vpop.trf.xlu0
        %v615 = vpop.trf.xlu0
        %v616 = vpop.trf.xlu0
        %vm617 = vcmask 130048
        %v619 = vsel %vm617, %v505, 0
        %v622 = vsel %vm617, %v506, 0
        %v625 = vsel %vm617, %v507, 0
        %v628 = vsel %vm617, %v508, 0
        %v631 = vsel %vm617, %v509, 0
        %v634 = vsel %vm617, %v510, 0
        %v637 = vsel %vm617, %v511, 0
        %v640 = vsel %vm617, %v512, 0
        %v643 = vsel %vm617, %v513, 0
        %v646 = vsel %vm617, %v514, 0
        %v649 = vsel %vm617, %v515, 0
        %v652 = vsel %vm617, %v516, 0
        %v655 = vsel %vm617, %v517, 0
        %v658 = vsel %vm617, %v518, 0
        %v661 = vsel %vm617, %v519, 0
        %v664 = vsel %vm617, %v520, 0
        %v667 = vsel %vm617, %v537, 0
        %v670 = vsel %vm617, %v538, 0
        %v673 = vsel %vm617, %v539, 0
        %v676 = vsel %vm617, %v540, 0
        %v679 = vsel %vm617, %v541, 0
        %v682 = vsel %vm617, %v542, 0
        %v685 = vsel %vm617, %v543, 0
        %v688 = vsel %vm617, %v544, 0
        %v691 = vsel %vm617, %v545, 0
        %v694 = vsel %vm617, %v546, 0
        %v697 = vsel %vm617, %v547, 0
        %v700 = vsel %vm617, %v548, 0
        %v703 = vsel %vm617, %v549, 0
        %v706 = vsel %vm617, %v550, 0
        %v709 = vsel %vm617, %v551, 0
        %v712 = vsel %vm617, %v552, 0
        %714 = vmatprep.subr.mxu0 0.0
        %715 = vmatpush1.msra.mxu0 0.0
        %716 = vmatprep.subr.mxu0 0.0
        %717 = vmatpush1.msra.mxu0 0.0
        %718 = vmatprep.subr.mxu0 0.0
        %719 = vmatpush1.msra.mxu0 0.0
        %720 = vmatprep.subr.mxu0 0.0
        %721 = vmatpush1.msra.mxu0 0.0
        %722 = vmatprep.subr.mxu0 0.0
        %723 = vmatpush1.msra.mxu0 0.0
        %724 = vmatprep.subr.mxu0 0.0
        %725 = vmatpush1.msra.mxu0 0.0
        %726 = vmatprep.subr.mxu0 0.0
        %727 = vmatpush1.msra.mxu0 0.0
        %728 = vmatprep.subr.mxu0 0.0
        %729 = vmatpush1.msra.mxu0 0.0
        %730 = vmatprep.subr.mxu0 0.0
        %731 = vmatpush1.msra.mxu0 0.0
        %732 = vmatprep.subr.mxu0 0.0
        %733 = vmatpush1.msra.mxu0 0.0
        %734 = vmatprep.subr.mxu0 0.0
        %735 = vmatpush1.msra.mxu0 0.0
        %736 = vmatprep.subr.mxu0 0.0
        %737 = vmatpush1.msra.mxu0 0.0
        %738 = vmatprep.subr.mxu0 0.0
        %739 = vmatpush1.msra.mxu0 0.0
        %740 = vmatprep.subr.mxu0 0.0
        %741 = vmatpush1.msra.mxu0 0.0
        %742 = vmatprep.subr.mxu0 %v451
        %743 = vmatpush1.msra.mxu0 %v449
        %744 = vmatprep.subr.mxu0 %v445
        %745 = vmatpush1.msra.mxu0 %v443
        %746 = vmatprep.subr.mxu0 0.0
        %747 = vmatpush2.msra.mxu0 0.0
        %748 = vmatprep.subr.mxu0 0.0
        %749 = vmatpush2.msra.mxu0 0.0
        %750 = vmatprep.subr.mxu0 0.0
        %751 = vmatpush2.msra.mxu0 0.0
        %752 = vmatprep.subr.mxu0 0.0
        %753 = vmatpush2.msra.mxu0 0.0
        %754 = vmatprep.subr.mxu0 0.0
        %755 = vmatpush2.msra.mxu0 0.0
        %756 = vmatprep.subr.mxu0 0.0
        %757 = vmatpush2.msra.mxu0 0.0
        %758 = vmatprep.subr.mxu0 0.0
        %759 = vmatpush2.msra.mxu0 0.0
        %760 = vmatprep.subr.mxu0 0.0
        %761 = vmatpush2.msra.mxu0 0.0
        %762 = vmatprep.subr.mxu0 0.0
        %763 = vmatpush2.msra.mxu0 0.0
        %764 = vmatprep.subr.mxu0 0.0
        %765 = vmatpush2.msra.mxu0 0.0
        %766 = vmatprep.subr.mxu0 0.0
        %767 = vmatpush2.msra.mxu0 0.0
        %768 = vmatprep.subr.mxu0 0.0
        %769 = vmatpush2.msra.mxu0 0.0
        %770 = vmatprep.subr.mxu0 0.0
        %771 = vmatpush2.msra.mxu0 0.0
        %772 = vmatprep.subr.mxu0 0.0
        %773 = vmatpush2.msra.mxu0 0.0
        %774 = vmatprep.subr.mxu0 0.0
        %775 = vmatpush2.msra.mxu0 0.0
        %776 = vmatprep.subr.mxu0 0.0
        %777 = vmatpush2.msra.mxu0 0.0
        %778 = vmatprep.mubr.f32.mxu0 0.0
        %779 = vmatmul.mubr.f32.gmra.mxu0 %v619
        %v780 = vpop.f32.mrf.mxu0
        %v781 = vadd.f32 0.0, %v780
        %v782 = vpop.f32.mrf.mxu0
        %v783 = vadd.f32 0.0, %v782
        %784 = vmatprep.mubr.f32.mxu0 0.0
        %785 = vmatmul.mubr.f32.gmra.mxu0 %v622
        %v786 = vpop.f32.mrf.mxu0
        %v787 = vadd.f32 0.0, %v786
        %v788 = vpop.f32.mrf.mxu0
        %v789 = vadd.f32 0.0, %v788
        %790 = vmatprep.mubr.f32.mxu0 0.0
        %791 = vmatmul.mubr.f32.gmra.mxu0 %v625
        %v792 = vpop.f32.mrf.mxu0
        %v793 = vadd.f32 0.0, %v792
        %v794 = vpop.f32.mrf.mxu0
        %v795 = vadd.f32 0.0, %v794
        %796 = vmatprep.mubr.f32.mxu0 0.0
        %797 = vmatmul.mubr.f32.gmra.mxu0 %v628
        %v798 = vpop.f32.mrf.mxu0
        %v799 = vadd.f32 0.0, %v798
        %v800 = vpop.f32.mrf.mxu0
        %v801 = vadd.f32 0.0, %v800
        %802 = vmatprep.mubr.f32.mxu0 0.0
        %803 = vmatmul.mubr.f32.gmra.mxu0 %v631
        %v804 = vpop.f32.mrf.mxu0
        %v805 = vadd.f32 0.0, %v804
        %v806 = vpop.f32.mrf.mxu0
        %v807 = vadd.f32 0.0, %v806
        %808 = vmatprep.mubr.f32.mxu0 0.0
        %809 = vmatmul.mubr.f32.gmra.mxu0 %v634
        %v810 = vpop.f32.mrf.mxu0
        %v811 = vadd.f32 0.0, %v810
        %v812 = vpop.f32.mrf.mxu0
        %v813 = vadd.f32 0.0, %v812
        %814 = vmatprep.mubr.f32.mxu0 0.0
        %815 = vmatmul.mubr.f32.gmra.mxu0 %v637
        %v816 = vpop.f32.mrf.mxu0
        %v817 = vadd.f32 0.0, %v816
        %v818 = vpop.f32.mrf.mxu0
        %v819 = vadd.f32 0.0, %v818
        %820 = vmatprep.mubr.f32.mxu0 0.0
        %821 = vmatmul.mubr.f32.gmra.mxu0 %v640
        %v822 = vpop.f32.mrf.mxu0
        %v823 = vadd.f32 0.0, %v822
        %v824 = vpop.f32.mrf.mxu0
        %v825 = vadd.f32 0.0, %v824
        %826 = vmatprep.mubr.f32.mxu0 0.0
        %827 = vmatmul.mubr.f32.gmra.mxu0 %v643
        %v828 = vpop.f32.mrf.mxu0
        %v829 = vadd.f32 0.0, %v828
        %v830 = vpop.f32.mrf.mxu0
        %v831 = vadd.f32 0.0, %v830
        %832 = vmatprep.mubr.f32.mxu0 0.0
        %833 = vmatmul.mubr.f32.gmra.mxu0 %v646
        %v834 = vpop.f32.mrf.mxu0
        %v835 = vadd.f32 0.0, %v834
        %v836 = vpop.f32.mrf.mxu0
        %v837 = vadd.f32 0.0, %v836
        %838 = vmatprep.mubr.f32.mxu0 0.0
        %839 = vmatmul.mubr.f32.gmra.mxu0 %v649
        %v840 = vpop.f32.mrf.mxu0
        %v841 = vadd.f32 0.0, %v840
        %v842 = vpop.f32.mrf.mxu0
        %v843 = vadd.f32 0.0, %v842
        %844 = vmatprep.mubr.f32.mxu0 0.0
        %845 = vmatmul.mubr.f32.gmra.mxu0 %v652
        %v846 = vpop.f32.mrf.mxu0
        %v847 = vadd.f32 0.0, %v846
        %v848 = vpop.f32.mrf.mxu0
        %v849 = vadd.f32 0.0, %v848
        %850 = vmatprep.mubr.f32.mxu0 0.0
        %851 = vmatmul.mubr.f32.gmra.mxu0 %v655
        %v852 = vpop.f32.mrf.mxu0
        %v853 = vadd.f32 0.0, %v852
        %v854 = vpop.f32.mrf.mxu0
        %v855 = vadd.f32 0.0, %v854
        %856 = vmatprep.mubr.f32.mxu0 0.0
        %857 = vmatmul.mubr.f32.gmra.mxu0 %v658
        %v858 = vpop.f32.mrf.mxu0
        %v859 = vadd.f32 0.0, %v858
        %v860 = vpop.f32.mrf.mxu0
        %v861 = vadd.f32 0.0, %v860
        %862 = vmatprep.mubr.f32.mxu0 0.0
        %863 = vmatmul.mubr.f32.gmra.mxu0 %v661
        %v864 = vpop.f32.mrf.mxu0
        %v865 = vadd.f32 0.0, %v864
        %v866 = vpop.f32.mrf.mxu0
        %v867 = vadd.f32 0.0, %v866
        %868 = vmatprep.mubr.f32.mxu0 0.0
        %869 = vmatmul.mubr.f32.gmra.mxu0 %v664
        %v870 = vpop.f32.mrf.mxu0
        %v871 = vadd.f32 0.0, %v870
        %v872 = vpop.f32.mrf.mxu0
        %v873 = vadd.f32 0.0, %v872
        %874 = vmatprep.mubr.f32.mxu0 0.0
        %875 = vmatmul.mubr.f32.gmra.mxu0 %v667
        %v876 = vpop.f32.mrf.mxu0
        %v877 = vadd.f32 0.0, %v876
        %v878 = vpop.f32.mrf.mxu0
        %v879 = vadd.f32 0.0, %v878
        %880 = vmatprep.mubr.f32.mxu0 0.0
        %881 = vmatmul.mubr.f32.gmra.mxu0 %v670
        %v882 = vpop.f32.mrf.mxu0
        %v883 = vadd.f32 0.0, %v882
        %v884 = vpop.f32.mrf.mxu0
        %v885 = vadd.f32 0.0, %v884
        %886 = vmatprep.mubr.f32.mxu0 0.0
        %887 = vmatmul.mubr.f32.gmra.mxu0 %v673
        %v888 = vpop.f32.mrf.mxu0
        %v889 = vadd.f32 0.0, %v888
        %v890 = vpop.f32.mrf.mxu0
        %v891 = vadd.f32 0.0, %v890
        %892 = vmatprep.mubr.f32.mxu0 0.0
        %893 = vmatmul.mubr.f32.gmra.mxu0 %v676
        %v894 = vpop.f32.mrf.mxu0
        %v895 = vadd.f32 0.0, %v894
        %v896 = vpop.f32.mrf.mxu0
        %v897 = vadd.f32 0.0, %v896
        %898 = vmatprep.mubr.f32.mxu0 0.0
        %899 = vmatmul.mubr.f32.gmra.mxu0 %v679
        %v900 = vpop.f32.mrf.mxu0
        %v901 = vadd.f32 0.0, %v900
        %v902 = vpop.f32.mrf.mxu0
        %v903 = vadd.f32 0.0, %v902
        %904 = vmatprep.mubr.f32.mxu0 0.0
        %905 = vmatmul.mubr.f32.gmra.mxu0 %v682
        %v906 = vpop.f32.mrf.mxu0
        %v907 = vadd.f32 0.0, %v906
        %v908 = vpop.f32.mrf.mxu0
        %v909 = vadd.f32 0.0, %v908
        %910 = vmatprep.mubr.f32.mxu0 0.0
        %911 = vmatmul.mubr.f32.gmra.mxu0 %v685
        %v912 = vpop.f32.mrf.mxu0
        %v913 = vadd.f32 0.0, %v912
        %v914 = vpop.f32.mrf.mxu0
        %v915 = vadd.f32 0.0, %v914
        %916 = vmatprep.mubr.f32.mxu0 0.0
        %917 = vmatmul.mubr.f32.gmra.mxu0 %v688
        %v918 = vpop.f32.mrf.mxu0
        %v919 = vadd.f32 0.0, %v918
        %v920 = vpop.f32.mrf.mxu0
        %v921 = vadd.f32 0.0, %v920
        %922 = vmatprep.mubr.f32.mxu0 0.0
        %923 = vmatmul.mubr.f32.gmra.mxu0 %v691
        %v924 = vpop.f32.mrf.mxu0
        %v925 = vadd.f32 0.0, %v924
        %v926 = vpop.f32.mrf.mxu0
        %v927 = vadd.f32 0.0, %v926
        %928 = vmatprep.mubr.f32.mxu0 0.0
        %929 = vmatmul.mubr.f32.gmra.mxu0 %v694
        %v930 = vpop.f32.mrf.mxu0
        %v931 = vadd.f32 0.0, %v930
        %v932 = vpop.f32.mrf.mxu0
        %v933 = vadd.f32 0.0, %v932
        %934 = vmatprep.mubr.f32.mxu0 0.0
        %935 = vmatmul.mubr.f32.gmra.mxu0 %v697
        %v936 = vpop.f32.mrf.mxu0
        %v937 = vadd.f32 0.0, %v936
        %v938 = vpop.f32.mrf.mxu0
        %v939 = vadd.f32 0.0, %v938
        %940 = vmatprep.mubr.f32.mxu0 0.0
        %941 = vmatmul.mubr.f32.gmra.mxu0 %v700
        %v942 = vpop.f32.mrf.mxu0
        %v943 = vadd.f32 0.0, %v942
        %v944 = vpop.f32.mrf.mxu0
        %v945 = vadd.f32 0.0, %v944
        %946 = vmatprep.mubr.f32.mxu0 0.0
        %947 = vmatmul.mubr.f32.gmra.mxu0 %v703
        %v948 = vpop.f32.mrf.mxu0
        %v949 = vadd.f32 0.0, %v948
        %v950 = vpop.f32.mrf.mxu0
        %v951 = vadd.f32 0.0, %v950
        %952 = vmatprep.mubr.f32.mxu0 0.0
        %953 = vmatmul.mubr.f32.gmra.mxu0 %v706
        %v954 = vpop.f32.mrf.mxu0
        %v955 = vadd.f32 0.0, %v954
        %v956 = vpop.f32.mrf.mxu0
        %v957 = vadd.f32 0.0, %v956
        %958 = vmatprep.mubr.f32.mxu0 0.0
        %959 = vmatmul.mubr.f32.gmra.mxu0 %v709
        %v960 = vpop.f32.mrf.mxu0
        %v961 = vadd.f32 0.0, %v960
        %v962 = vpop.f32.mrf.mxu0
        %v963 = vadd.f32 0.0, %v962
        %964 = vmatprep.mubr.f32.mxu0 0.0
        %965 = vmatmul.mubr.f32.gmra.mxu0 %v712
        %v966 = vpop.f32.mrf.mxu0
        %v967 = vadd.f32 0.0, %v966
        %v968 = vpop.f32.mrf.mxu0
        %v969 = vadd.f32 0.0, %v968
        %970 = vdwg.mxu0
        %v972 = vsel %vm617, %v569, 0
        %v975 = vsel %vm617, %v570, 0
        %v978 = vsel %vm617, %v571, 0
        %v981 = vsel %vm617, %v572, 0
        %v984 = vsel %vm617, %v573, 0
        %v987 = vsel %vm617, %v574, 0
        %v990 = vsel %vm617, %v575, 0
        %v993 = vsel %vm617, %v576, 0
        %v996 = vsel %vm617, %v577, 0
        %v999 = vsel %vm617, %v578, 0
        %v1002 = vsel %vm617, %v579, 0
        %v1005 = vsel %vm617, %v580, 0
        %v1008 = vsel %vm617, %v581, 0
        %v1011 = vsel %vm617, %v582, 0
        %v1014 = vsel %vm617, %v583, 0
        %v1017 = vsel %vm617, %v584, 0
        %v1020 = vsel %vm617, %v601, 0
        %v1023 = vsel %vm617, %v602, 0
        %v1026 = vsel %vm617, %v603, 0
        %v1029 = vsel %vm617, %v604, 0
        %v1032 = vsel %vm617, %v605, 0
        %v1035 = vsel %vm617, %v606, 0
        %v1038 = vsel %vm617, %v607, 0
        %v1041 = vsel %vm617, %v608, 0
        %v1044 = vsel %vm617, %v609, 0
        %v1047 = vsel %vm617, %v610, 0
        %v1050 = vsel %vm617, %v611, 0
        %v1053 = vsel %vm617, %v612, 0
        %v1056 = vsel %vm617, %v613, 0
        %v1059 = vsel %vm617, %v614, 0
        %v1062 = vsel %vm617, %v615, 0
        %v1065 = vsel %vm617, %v616, 0
        %1067 = vmatprep.subr.mxu0 0.0
        %1068 = vmatpush1.msra.mxu0 0.0
        %1069 = vmatprep.subr.mxu0 0.0
        %1070 = vmatpush1.msra.mxu0 0.0
        %1071 = vmatprep.subr.mxu0 0.0
        %1072 = vmatpush1.msra.mxu0 0.0
        %1073 = vmatprep.subr.mxu0 0.0
        %1074 = vmatpush1.msra.mxu0 0.0
        %1075 = vmatprep.subr.mxu0 0.0
        %1076 = vmatpush1.msra.mxu0 0.0
        %1077 = vmatprep.subr.mxu0 0.0
        %1078 = vmatpush1.msra.mxu0 0.0
        %1079 = vmatprep.subr.mxu0 0.0
        %1080 = vmatpush1.msra.mxu0 0.0
        %1081 = vmatprep.subr.mxu0 0.0
        %1082 = vmatpush1.msra.mxu0 0.0
        %1083 = vmatprep.subr.mxu0 0.0
        %1084 = vmatpush1.msra.mxu0 0.0
        %1085 = vmatprep.subr.mxu0 0.0
        %1086 = vmatpush1.msra.mxu0 0.0
        %1087 = vmatprep.subr.mxu0 0.0
        %1088 = vmatpush1.msra.mxu0 0.0
        %1089 = vmatprep.subr.mxu0 0.0
        %1090 = vmatpush1.msra.mxu0 0.0
        %1091 = vmatprep.subr.mxu0 0.0
        %1092 = vmatpush1.msra.mxu0 0.0
        %1093 = vmatprep.subr.mxu0 0.0
        %1094 = vmatpush1.msra.mxu0 0.0
        %1095 = vmatprep.subr.mxu0 %v463
        %1096 = vmatpush1.msra.mxu0 %v461
        %1097 = vmatprep.subr.mxu0 %v457
        %1098 = vmatpush1.msra.mxu0 %v455
        %1099 = vmatprep.subr.mxu0 0.0
        %1100 = vmatpush2.msra.mxu0 0.0
        %1101 = vmatprep.subr.mxu0 0.0
        %1102 = vmatpush2.msra.mxu0 0.0
        %1103 = vmatprep.subr.mxu0 0.0
        %1104 = vmatpush2.msra.mxu0 0.0
        %1105 = vmatprep.subr.mxu0 0.0
        %1106 = vmatpush2.msra.mxu0 0.0
        %1107 = vmatprep.subr.mxu0 0.0
        %1108 = vmatpush2.msra.mxu0 0.0
        %1109 = vmatprep.subr.mxu0 0.0
        %1110 = vmatpush2.msra.mxu0 0.0
        %1111 = vmatprep.subr.mxu0 0.0
        %1112 = vmatpush2.msra.mxu0 0.0
        %1113 = vmatprep.subr.mxu0 0.0
        %1114 = vmatpush2.msra.mxu0 0.0
        %1115 = vmatprep.subr.mxu0 0.0
        %1116 = vmatpush2.msra.mxu0 0.0
        %1117 = vmatprep.subr.mxu0 0.0
        %1118 = vmatpush2.msra.mxu0 0.0
        %1119 = vmatprep.subr.mxu0 0.0
        %1120 = vmatpush2.msra.mxu0 0.0
        %1121 = vmatprep.subr.mxu0 0.0
        %1122 = vmatpush2.msra.mxu0 0.0
        %1123 = vmatprep.subr.mxu0 0.0
        %1124 = vmatpush2.msra.mxu0 0.0
        %1125 = vmatprep.subr.mxu0 0.0
        %1126 = vmatpush2.msra.mxu0 0.0
        %1127 = vmatprep.subr.mxu0 0.0
        %1128 = vmatpush2.msra.mxu0 0.0
        %1129 = vmatprep.subr.mxu0 0.0
        %1130 = vmatpush2.msra.mxu0 0.0
        %1131 = vmatprep.mubr.f32.mxu0 0.0
        %1132 = vmatmul.mubr.f32.gmra.mxu0 %v972
        %v1133 = vpop.f32.mrf.mxu0
        %v1134 = vadd.f32 0.0, %v1133
        %v1135 = vpop.f32.mrf.mxu0
        %v1136 = vadd.f32 0.0, %v1135
        %1137 = vmatprep.mubr.f32.mxu0 0.0
        %1138 = vmatmul.mubr.f32.gmra.mxu0 %v975
        %v1139 = vpop.f32.mrf.mxu0
        %v1140 = vadd.f32 0.0, %v1139
        %v1141 = vpop.f32.mrf.mxu0
        %v1142 = vadd.f32 0.0, %v1141
        %1143 = vmatprep.mubr.f32.mxu0 0.0
        %1144 = vmatmul.mubr.f32.gmra.mxu0 %v978
        %v1145 = vpop.f32.mrf.mxu0
        %v1146 = vadd.f32 0.0, %v1145
        %v1147 = vpop.f32.mrf.mxu0
        %v1148 = vadd.f32 0.0, %v1147
        %1149 = vmatprep.mubr.f32.mxu0 0.0
        %1150 = vmatmul.mubr.f32.gmra.mxu0 %v981
        %v1151 = vpop.f32.mrf.mxu0
        %v1152 = vadd.f32 0.0, %v1151
        %v1153 = vpop.f32.mrf.mxu0
        %v1154 = vadd.f32 0.0, %v1153
        %1155 = vmatprep.mubr.f32.mxu0 0.0
        %1156 = vmatmul.mubr.f32.gmra.mxu0 %v984
        %v1157 = vpop.f32.mrf.mxu0
        %v1158 = vadd.f32 0.0, %v1157
        %v1159 = vpop.f32.mrf.mxu0
        %v1160 = vadd.f32 0.0, %v1159
        %1161 = vmatprep.mubr.f32.mxu0 0.0
        %1162 = vmatmul.mubr.f32.gmra.mxu0 %v987
        %v1163 = vpop.f32.mrf.mxu0
        %v1164 = vadd.f32 0.0, %v1163
        %v1165 = vpop.f32.mrf.mxu0
        %v1166 = vadd.f32 0.0, %v1165
        %1167 = vmatprep.mubr.f32.mxu0 0.0
        %1168 = vmatmul.mubr.f32.gmra.mxu0 %v990
        %v1169 = vpop.f32.mrf.mxu0
        %v1170 = vadd.f32 0.0, %v1169
        %v1171 = vpop.f32.mrf.mxu0
        %v1172 = vadd.f32 0.0, %v1171
        %1173 = vmatprep.mubr.f32.mxu0 0.0
        %1174 = vmatmul.mubr.f32.gmra.mxu0 %v993
        %v1175 = vpop.f32.mrf.mxu0
        %v1176 = vadd.f32 0.0, %v1175
        %v1177 = vpop.f32.mrf.mxu0
        %v1178 = vadd.f32 0.0, %v1177
        %1179 = vmatprep.mubr.f32.mxu0 0.0
        %1180 = vmatmul.mubr.f32.gmra.mxu0 %v996
        %v1181 = vpop.f32.mrf.mxu0
        %v1182 = vadd.f32 0.0, %v1181
        %v1183 = vpop.f32.mrf.mxu0
        %v1184 = vadd.f32 0.0, %v1183
        %1185 = vmatprep.mubr.f32.mxu0 0.0
        %1186 = vmatmul.mubr.f32.gmra.mxu0 %v999
        %v1187 = vpop.f32.mrf.mxu0
        %v1188 = vadd.f32 0.0, %v1187
        %v1189 = vpop.f32.mrf.mxu0
        %v1190 = vadd.f32 0.0, %v1189
        %1191 = vmatprep.mubr.f32.mxu0 0.0
        %1192 = vmatmul.mubr.f32.gmra.mxu0 %v1002
        %v1193 = vpop.f32.mrf.mxu0
        %v1194 = vadd.f32 0.0, %v1193
        %v1195 = vpop.f32.mrf.mxu0
        %v1196 = vadd.f32 0.0, %v1195
        %1197 = vmatprep.mubr.f32.mxu0 0.0
        %1198 = vmatmul.mubr.f32.gmra.mxu0 %v1005
        %v1199 = vpop.f32.mrf.mxu0
        %v1200 = vadd.f32 0.0, %v1199
        %v1201 = vpop.f32.mrf.mxu0
        %v1202 = vadd.f32 0.0, %v1201
        %1203 = vmatprep.mubr.f32.mxu0 0.0
        %1204 = vmatmul.mubr.f32.gmra.mxu0 %v1008
        %v1205 = vpop.f32.mrf.mxu0
        %v1206 = vadd.f32 0.0, %v1205
        %v1207 = vpop.f32.mrf.mxu0
        %v1208 = vadd.f32 0.0, %v1207
        %1209 = vmatprep.mubr.f32.mxu0 0.0
        %1210 = vmatmul.mubr.f32.gmra.mxu0 %v1011
        %v1211 = vpop.f32.mrf.mxu0
        %v1212 = vadd.f32 0.0, %v1211
        %v1213 = vpop.f32.mrf.mxu0
        %v1214 = vadd.f32 0.0, %v1213
        %1215 = vmatprep.mubr.f32.mxu0 0.0
        %1216 = vmatmul.mubr.f32.gmra.mxu0 %v1014
        %v1217 = vpop.f32.mrf.mxu0
        %v1218 = vadd.f32 0.0, %v1217
        %v1219 = vpop.f32.mrf.mxu0
        %v1220 = vadd.f32 0.0, %v1219
        %1221 = vmatprep.mubr.f32.mxu0 0.0
        %1222 = vmatmul.mubr.f32.gmra.mxu0 %v1017
        %v1223 = vpop.f32.mrf.mxu0
        %v1224 = vadd.f32 0.0, %v1223
        %v1225 = vpop.f32.mrf.mxu0
        %v1226 = vadd.f32 0.0, %v1225
        %1227 = vmatprep.mubr.f32.mxu0 0.0
        %1228 = vmatmul.mubr.f32.gmra.mxu0 %v1020
        %v1229 = vpop.f32.mrf.mxu0
        %v1230 = vadd.f32 0.0, %v1229
        %v1231 = vpop.f32.mrf.mxu0
        %v1232 = vadd.f32 0.0, %v1231
        %1233 = vmatprep.mubr.f32.mxu0 0.0
        %1234 = vmatmul.mubr.f32.gmra.mxu0 %v1023
        %v1235 = vpop.f32.mrf.mxu0
        %v1236 = vadd.f32 0.0, %v1235
        %v1237 = vpop.f32.mrf.mxu0
        %v1238 = vadd.f32 0.0, %v1237
        %1239 = vmatprep.mubr.f32.mxu0 0.0
        %1240 = vmatmul.mubr.f32.gmra.mxu0 %v1026
        %v1241 = vpop.f32.mrf.mxu0
        %v1242 = vadd.f32 0.0, %v1241
        %v1243 = vpop.f32.mrf.mxu0
        %v1244 = vadd.f32 0.0, %v1243
        %1245 = vmatprep.mubr.f32.mxu0 0.0
        %1246 = vmatmul.mubr.f32.gmra.mxu0 %v1029
        %v1247 = vpop.f32.mrf.mxu0
        %v1248 = vadd.f32 0.0, %v1247
        %v1249 = vpop.f32.mrf.mxu0
        %v1250 = vadd.f32 0.0, %v1249
        %1251 = vmatprep.mubr.f32.mxu0 0.0
        %1252 = vmatmul.mubr.f32.gmra.mxu0 %v1032
        %v1253 = vpop.f32.mrf.mxu0
        %v1254 = vadd.f32 0.0, %v1253
        %v1255 = vpop.f32.mrf.mxu0
        %v1256 = vadd.f32 0.0, %v1255
        %1257 = vmatprep.mubr.f32.mxu0 0.0
        %1258 = vmatmul.mubr.f32.gmra.mxu0 %v1035
        %v1259 = vpop.f32.mrf.mxu0
        %v1260 = vadd.f32 0.0, %v1259
        %v1261 = vpop.f32.mrf.mxu0
        %v1262 = vadd.f32 0.0, %v1261
        %1263 = vmatprep.mubr.f32.mxu0 0.0
        %1264 = vmatmul.mubr.f32.gmra.mxu0 %v1038
        %v1265 = vpop.f32.mrf.mxu0
        %v1266 = vadd.f32 0.0, %v1265
        %v1267 = vpop.f32.mrf.mxu0
        %v1268 = vadd.f32 0.0, %v1267
        %1269 = vmatprep.mubr.f32.mxu0 0.0
        %1270 = vmatmul.mubr.f32.gmra.mxu0 %v1041
        %v1271 = vpop.f32.mrf.mxu0
        %v1272 = vadd.f32 0.0, %v1271
        %v1273 = vpop.f32.mrf.mxu0
        %v1274 = vadd.f32 0.0, %v1273
        %1275 = vmatprep.mubr.f32.mxu0 0.0
        %1276 = vmatmul.mubr.f32.gmra.mxu0 %v1044
        %v1277 = vpop.f32.mrf.mxu0
        %v1278 = vadd.f32 0.0, %v1277
        %v1279 = vpop.f32.mrf.mxu0
        %v1280 = vadd.f32 0.0, %v1279
        %1281 = vmatprep.mubr.f32.mxu0 0.0
        %1282 = vmatmul.mubr.f32.gmra.mxu0 %v1047
        %v1283 = vpop.f32.mrf.mxu0
        %v1284 = vadd.f32 0.0, %v1283
        %v1285 = vpop.f32.mrf.mxu0
        %v1286 = vadd.f32 0.0, %v1285
        %1287 = vmatprep.mubr.f32.mxu0 0.0
        %1288 = vmatmul.mubr.f32.gmra.mxu0 %v1050
        %v1289 = vpop.f32.mrf.mxu0
        %v1290 = vadd.f32 0.0, %v1289
        %v1291 = vpop.f32.mrf.mxu0
        %v1292 = vadd.f32 0.0, %v1291
        %1293 = vmatprep.mubr.f32.mxu0 0.0
        %1294 = vmatmul.mubr.f32.gmra.mxu0 %v1053
        %v1295 = vpop.f32.mrf.mxu0
        %v1296 = vadd.f32 0.0, %v1295
        %v1297 = vpop.f32.mrf.mxu0
        %v1298 = vadd.f32 0.0, %v1297
        %1299 = vmatprep.mubr.f32.mxu0 0.0
        %1300 = vmatmul.mubr.f32.gmra.mxu0 %v1056
        %v1301 = vpop.f32.mrf.mxu0
        %v1302 = vadd.f32 0.0, %v1301
        %v1303 = vpop.f32.mrf.mxu0
        %v1304 = vadd.f32 0.0, %v1303
        %1305 = vmatprep.mubr.f32.mxu0 0.0
        %1306 = vmatmul.mubr.f32.gmra.mxu0 %v1059
        %v1307 = vpop.f32.mrf.mxu0
        %v1308 = vadd.f32 0.0, %v1307
        %v1309 = vpop.f32.mrf.mxu0
        %v1310 = vadd.f32 0.0, %v1309
        %1311 = vmatprep.mubr.f32.mxu0 0.0
        %1312 = vmatmul.mubr.f32.gmra.mxu0 %v1062
        %v1313 = vpop.f32.mrf.mxu0
        %v1314 = vadd.f32 0.0, %v1313
        %v1315 = vpop.f32.mrf.mxu0
        %v1316 = vadd.f32 0.0, %v1315
        %1317 = vmatprep.mubr.f32.mxu0 0.0
        %1318 = vmatmul.mubr.f32.gmra.mxu0 %v1065
        %v1319 = vpop.f32.mrf.mxu0
        %v1320 = vadd.f32 0.0, %v1319
        %v1321 = vpop.f32.mrf.mxu0
        %v1322 = vadd.f32 0.0, %v1321
        %1323 = vdwg.mxu0
        %v1324 = vmax.f32 %v781, %v783
        %1325 = vmax.xlane.f32.xlu0 %v1324
        %v1326 = vpop.xlane.xlu0 %1325
        %v1327 = vmax.f32 %v787, %v789
        %1328 = vmax.xlane.f32.xlu0 %v1327
        %v1329 = vpop.xlane.xlu0 %1328
        %v1330 = vmax.f32 %v793, %v795
        %1331 = vmax.xlane.f32.xlu0 %v1330
        %v1332 = vpop.xlane.xlu0 %1331
        %v1333 = vmax.f32 %v799, %v801
        %1334 = vmax.xlane.f32.xlu0 %v1333
        %v1335 = vpop.xlane.xlu0 %1334
        %v1336 = vmax.f32 %v805, %v807
        %1337 = vmax.xlane.f32.xlu0 %v1336
        %v1338 = vpop.xlane.xlu0 %1337
        %v1339 = vmax.f32 %v811, %v813
        %1340 = vmax.xlane.f32.xlu0 %v1339
        %v1341 = vpop.xlane.xlu0 %1340
        %v1342 = vmax.f32 %v817, %v819
        %1343 = vmax.xlane.f32.xlu0 %v1342
        %v1344 = vpop.xlane.xlu0 %1343
        %v1345 = vmax.f32 %v823, %v825
        %1346 = vmax.xlane.f32.xlu0 %v1345
        %v1347 = vpop.xlane.xlu0 %1346
        %v1348 = vmax.f32 %v829, %v831
        %1349 = vmax.xlane.f32.xlu0 %v1348
        %v1350 = vpop.xlane.xlu0 %1349
        %v1351 = vmax.f32 %v835, %v837
        %1352 = vmax.xlane.f32.xlu0 %v1351
        %v1353 = vpop.xlane.xlu0 %1352
        %v1354 = vmax.f32 %v841, %v843
        %1355 = vmax.xlane.f32.xlu0 %v1354
        %v1356 = vpop.xlane.xlu0 %1355
        %v1357 = vmax.f32 %v847, %v849
        %1358 = vmax.xlane.f32.xlu0 %v1357
        %v1359 = vpop.xlane.xlu0 %1358
        %v1360 = vmax.f32 %v853, %v855
        %1361 = vmax.xlane.f32.xlu0 %v1360
        %v1362 = vpop.xlane.xlu0 %1361
        %v1363 = vmax.f32 %v859, %v861
        %1364 = vmax.xlane.f32.xlu0 %v1363
        %v1365 = vpop.xlane.xlu0 %1364
        %v1366 = vmax.f32 %v865, %v867
        %1367 = vmax.xlane.f32.xlu0 %v1366
        %v1368 = vpop.xlane.xlu0 %1367
        %v1369 = vmax.f32 %v871, %v873
        %1370 = vmax.xlane.f32.xlu0 %v1369
        %v1371 = vpop.xlane.xlu0 %1370
        %v1372 = vmax.f32 %v877, %v879
        %1373 = vmax.xlane.f32.xlu0 %v1372
        %v1374 = vpop.xlane.xlu0 %1373
        %v1375 = vmax.f32 %v883, %v885
        %1376 = vmax.xlane.f32.xlu0 %v1375
        %v1377 = vpop.xlane.xlu0 %1376
        %v1378 = vmax.f32 %v889, %v891
        %1379 = vmax.xlane.f32.xlu0 %v1378
        %v1380 = vpop.xlane.xlu0 %1379
        %v1381 = vmax.f32 %v895, %v897
        %1382 = vmax.xlane.f32.xlu0 %v1381
        %v1383 = vpop.xlane.xlu0 %1382
        %v1384 = vmax.f32 %v901, %v903
        %1385 = vmax.xlane.f32.xlu0 %v1384
        %v1386 = vpop.xlane.xlu0 %1385
        %v1387 = vmax.f32 %v907, %v909
        %1388 = vmax.xlane.f32.xlu0 %v1387
        %v1389 = vpop.xlane.xlu0 %1388
        %v1390 = vmax.f32 %v913, %v915
        %1391 = vmax.xlane.f32.xlu0 %v1390
        %v1392 = vpop.xlane.xlu0 %1391
        %v1393 = vmax.f32 %v919, %v921
        %1394 = vmax.xlane.f32.xlu0 %v1393
        %v1395 = vpop.xlane.xlu0 %1394
        %v1396 = vmax.f32 %v925, %v927
        %1397 = vmax.xlane.f32.xlu0 %v1396
        %v1398 = vpop.xlane.xlu0 %1397
        %v1399 = vmax.f32 %v931, %v933
        %1400 = vmax.xlane.f32.xlu0 %v1399
        %v1401 = vpop.xlane.xlu0 %1400
        %v1402 = vmax.f32 %v937, %v939
        %1403 = vmax.xlane.f32.xlu0 %v1402
        %v1404 = vpop.xlane.xlu0 %1403
        %v1405 = vmax.f32 %v943, %v945
        %1406 = vmax.xlane.f32.xlu0 %v1405
        %v1407 = vpop.xlane.xlu0 %1406
        %v1408 = vmax.f32 %v949, %v951
        %1409 = vmax.xlane.f32.xlu0 %v1408
        %v1410 = vpop.xlane.xlu0 %1409
        %v1411 = vmax.f32 %v955, %v957
        %1412 = vmax.xlane.f32.xlu0 %v1411
        %v1413 = vpop.xlane.xlu0 %1412
        %v1414 = vmax.f32 %v961, %v963
        %1415 = vmax.xlane.f32.xlu0 %v1414
        %v1416 = vpop.xlane.xlu0 %1415
        %v1417 = vmax.f32 %v967, %v969
        %1418 = vmax.xlane.f32.xlu0 %v1417
        %v1419 = vpop.xlane.xlu0 %1418
        %v1420 = vmax.f32 %v1134, %v1136
        %1421 = vmax.xlane.f32.xlu0 %v1420
        %v1422 = vpop.xlane.xlu0 %1421
        %v1423 = vmax.f32 %v1140, %v1142
        %1424 = vmax.xlane.f32.xlu0 %v1423
        %v1425 = vpop.xlane.xlu0 %1424
        %v1426 = vmax.f32 %v1146, %v1148
        %1427 = vmax.xlane.f32.xlu0 %v1426
        %v1428 = vpop.xlane.xlu0 %1427
        %v1429 = vmax.f32 %v1152, %v1154
        %1430 = vmax.xlane.f32.xlu0 %v1429
        %v1431 = vpop.xlane.xlu0 %1430
        %v1432 = vmax.f32 %v1158, %v1160
        %1433 = vmax.xlane.f32.xlu0 %v1432
        %v1434 = vpop.xlane.xlu0 %1433
        %v1435 = vmax.f32 %v1164, %v1166
        %1436 = vmax.xlane.f32.xlu0 %v1435
        %v1437 = vpop.xlane.xlu0 %1436
        %v1438 = vmax.f32 %v1170, %v1172
        %1439 = vmax.xlane.f32.xlu0 %v1438
        %v1440 = vpop.xlane.xlu0 %1439
        %v1441 = vmax.f32 %v1176, %v1178
        %1442 = vmax.xlane.f32.xlu0 %v1441
        %v1443 = vpop.xlane.xlu0 %1442
        %v1444 = vmax.f32 %v1182, %v1184
        %1445 = vmax.xlane.f32.xlu0 %v1444
        %v1446 = vpop.xlane.xlu0 %1445
        %v1447 = vmax.f32 %v1188, %v1190
        %1448 = vmax.xlane.f32.xlu0 %v1447
        %v1449 = vpop.xlane.xlu0 %1448
        %v1450 = vmax.f32 %v1194, %v1196
        %1451 = vmax.xlane.f32.xlu0 %v1450
        %v1452 = vpop.xlane.xlu0 %1451
        %v1453 = vmax.f32 %v1200, %v1202
        %1454 = vmax.xlane.f32.xlu0 %v1453
        %v1455 = vpop.xlane.xlu0 %1454
        %v1456 = vmax.f32 %v1206, %v1208
        %1457 = vmax.xlane.f32.xlu0 %v1456
        %v1458 = vpop.xlane.xlu0 %1457
        %v1459 = vmax.f32 %v1212, %v1214
        %1460 = vmax.xlane.f32.xlu0 %v1459
        %v1461 = vpop.xlane.xlu0 %1460
        %v1462 = vmax.f32 %v1218, %v1220
        %1463 = vmax.xlane.f32.xlu0 %v1462
        %v1464 = vpop.xlane.xlu0 %1463
        %v1465 = vmax.f32 %v1224, %v1226
        %1466 = vmax.xlane.f32.xlu0 %v1465
        %v1467 = vpop.xlane.xlu0 %1466
        %v1468 = vmax.f32 %v1230, %v1232
        %1469 = vmax.xlane.f32.xlu0 %v1468
        %v1470 = vpop.xlane.xlu0 %1469
        %v1471 = vmax.f32 %v1236, %v1238
        %1472 = vmax.xlane.f32.xlu0 %v1471
        %v1473 = vpop.xlane.xlu0 %1472
        %v1474 = vmax.f32 %v1242, %v1244
        %1475 = vmax.xlane.f32.xlu0 %v1474
        %v1476 = vpop.xlane.xlu0 %1475
        %v1477 = vmax.f32 %v1248, %v1250
        %1478 = vmax.xlane.f32.xlu0 %v1477
        %v1479 = vpop.xlane.xlu0 %1478
        %v1480 = vmax.f32 %v1254, %v1256
        %1481 = vmax.xlane.f32.xlu0 %v1480
        %v1482 = vpop.xlane.xlu0 %1481
        %v1483 = vmax.f32 %v1260, %v1262
        %1484 = vmax.xlane.f32.xlu0 %v1483
        %v1485 = vpop.xlane.xlu0 %1484
        %v1486 = vmax.f32 %v1266, %v1268
        %1487 = vmax.xlane.f32.xlu0 %v1486
        %v1488 = vpop.xlane.xlu0 %1487
        %v1489 = vmax.f32 %v1272, %v1274
        %1490 = vmax.xlane.f32.xlu0 %v1489
        %v1491 = vpop.xlane.xlu0 %1490
        %v1492 = vmax.f32 %v1278, %v1280
        %1493 = vmax.xlane.f32.xlu0 %v1492
        %v1494 = vpop.xlane.xlu0 %1493
        %v1495 = vmax.f32 %v1284, %v1286
        %1496 = vmax.xlane.f32.xlu0 %v1495
        %v1497 = vpop.xlane.xlu0 %1496
        %v1498 = vmax.f32 %v1290, %v1292
        %1499 = vmax.xlane.f32.xlu0 %v1498
        %v1500 = vpop.xlane.xlu0 %1499
        %v1501 = vmax.f32 %v1296, %v1298
        %1502 = vmax.xlane.f32.xlu0 %v1501
        %v1503 = vpop.xlane.xlu0 %1502
        %v1504 = vmax.f32 %v1302, %v1304
        %1505 = vmax.xlane.f32.xlu0 %v1504
        %v1506 = vpop.xlane.xlu0 %1505
        %v1507 = vmax.f32 %v1308, %v1310
        %1508 = vmax.xlane.f32.xlu0 %v1507
        %v1509 = vpop.xlane.xlu0 %1508
        %v1510 = vmax.f32 %v1314, %v1316
        %1511 = vmax.xlane.f32.xlu0 %v1510
        %v1512 = vpop.xlane.xlu0 %1511
        %v1513 = vmax.f32 %v1320, %v1322
        %1514 = vmax.xlane.f32.xlu0 %v1513
        %v1515 = vpop.xlane.xlu0 %1514
        %v1516 = vsub.f32 %v781, %v1326
        %v1517 = vsub.f32 %v783, %v1326
        %v1518 = vsub.f32 %v787, %v1329
        %v1519 = vsub.f32 %v789, %v1329
        %v1520 = vsub.f32 %v793, %v1332
        %v1521 = vsub.f32 %v795, %v1332
        %v1522 = vsub.f32 %v799, %v1335
        %v1523 = vsub.f32 %v801, %v1335
        %v1524 = vsub.f32 %v805, %v1338
        %v1525 = vsub.f32 %v807, %v1338
        %v1526 = vsub.f32 %v811, %v1341
        %v1527 = vsub.f32 %v813, %v1341
        %v1528 = vsub.f32 %v817, %v1344
        %v1529 = vsub.f32 %v819, %v1344
        %v1530 = vsub.f32 %v823, %v1347
        %v1531 = vsub.f32 %v825, %v1347
        %v1532 = vsub.f32 %v829, %v1350
        %v1533 = vsub.f32 %v831, %v1350
        %v1534 = vsub.f32 %v835, %v1353
        %v1535 = vsub.f32 %v837, %v1353
        %v1536 = vsub.f32 %v841, %v1356
        %v1537 = vsub.f32 %v843, %v1356
        %v1538 = vsub.f32 %v847, %v1359
        %v1539 = vsub.f32 %v849, %v1359
        %v1540 = vsub.f32 %v853, %v1362
        %v1541 = vsub.f32 %v855, %v1362
        %v1542 = vsub.f32 %v859, %v1365
        %v1543 = vsub.f32 %v861, %v1365
        %v1544 = vsub.f32 %v865, %v1368
        %v1545 = vsub.f32 %v867, %v1368
        %v1546 = vsub.f32 %v871, %v1371
        %v1547 = vsub.f32 %v873, %v1371
        %v1548 = vsub.f32 %v877, %v1374
        %v1549 = vsub.f32 %v879, %v1374
        %v1550 = vsub.f32 %v883, %v1377
        %v1551 = vsub.f32 %v885, %v1377
        %v1552 = vsub.f32 %v889, %v1380
        %v1553 = vsub.f32 %v891, %v1380
        %v1554 = vsub.f32 %v895, %v1383
        %v1555 = vsub.f32 %v897, %v1383
        %v1556 = vsub.f32 %v901, %v1386
        %v1557 = vsub.f32 %v903, %v1386
        %v1558 = vsub.f32 %v907, %v1389
        %v1559 = vsub.f32 %v909, %v1389
        %v1560 = vsub.f32 %v913, %v1392
        %v1561 = vsub.f32 %v915, %v1392
        %v1562 = vsub.f32 %v919, %v1395
        %v1563 = vsub.f32 %v921, %v1395
        %v1564 = vsub.f32 %v925, %v1398
        %v1565 = vsub.f32 %v927, %v1398
        %v1566 = vsub.f32 %v931, %v1401
        %v1567 = vsub.f32 %v933, %v1401
        %v1568 = vsub.f32 %v937, %v1404
        %v1569 = vsub.f32 %v939, %v1404
        %v1570 = vsub.f32 %v943, %v1407
        %v1571 = vsub.f32 %v945, %v1407
        %v1572 = vsub.f32 %v949, %v1410
        %v1573 = vsub.f32 %v951, %v1410
        %v1574 = vsub.f32 %v955, %v1413
        %v1575 = vsub.f32 %v957, %v1413
        %v1576 = vsub.f32 %v961, %v1416
        %v1577 = vsub.f32 %v963, %v1416
        %v1578 = vsub.f32 %v967, %v1419
        %v1579 = vsub.f32 %v969, %v1419
        %v1580 = vsub.f32 %v1134, %v1422
        %v1581 = vsub.f32 %v1136, %v1422
        %v1582 = vsub.f32 %v1140, %v1425
        %v1583 = vsub.f32 %v1142, %v1425
        %v1584 = vsub.f32 %v1146, %v1428
        %v1585 = vsub.f32 %v1148, %v1428
        %v1586 = vsub.f32 %v1152, %v1431
        %v1587 = vsub.f32 %v1154, %v1431
        %v1588 = vsub.f32 %v1158, %v1434
        %v1589 = vsub.f32 %v1160, %v1434
        %v1590 = vsub.f32 %v1164, %v1437
        %v1591 = vsub.f32 %v1166, %v1437
        %v1592 = vsub.f32 %v1170, %v1440
        %v1593 = vsub.f32 %v1172, %v1440
        %v1594 = vsub.f32 %v1176, %v1443
        %v1595 = vsub.f32 %v1178, %v1443
        %v1596 = vsub.f32 %v1182, %v1446
        %v1597 = vsub.f32 %v1184, %v1446
        %v1598 = vsub.f32 %v1188, %v1449
        %v1599 = vsub.f32 %v1190, %v1449
        %v1600 = vsub.f32 %v1194, %v1452
        %v1601 = vsub.f32 %v1196, %v1452
        %v1602 = vsub.f32 %v1200, %v1455
        %v1603 = vsub.f32 %v1202, %v1455
        %v1604 = vsub.f32 %v1206, %v1458
        %v1605 = vsub.f32 %v1208, %v1458
        %v1606 = vsub.f32 %v1212, %v1461
        %v1607 = vsub.f32 %v1214, %v1461
        %v1608 = vsub.f32 %v1218, %v1464
        %v1609 = vsub.f32 %v1220, %v1464
        %v1610 = vsub.f32 %v1224, %v1467
        %v1611 = vsub.f32 %v1226, %v1467
        %v1612 = vsub.f32 %v1230, %v1470
        %v1613 = vsub.f32 %v1232, %v1470
        %v1614 = vsub.f32 %v1236, %v1473
        %v1615 = vsub.f32 %v1238, %v1473
        %v1616 = vsub.f32 %v1242, %v1476
        %v1617 = vsub.f32 %v1244, %v1476
        %v1618 = vsub.f32 %v1248, %v1479
        %v1619 = vsub.f32 %v1250, %v1479
        %v1620 = vsub.f32 %v1254, %v1482
        %v1621 = vsub.f32 %v1256, %v1482
        %v1622 = vsub.f32 %v1260, %v1485
        %v1623 = vsub.f32 %v1262, %v1485
        %v1624 = vsub.f32 %v1266, %v1488
        %v1625 = vsub.f32 %v1268, %v1488
        %v1626 = vsub.f32 %v1272, %v1491
        %v1627 = vsub.f32 %v1274, %v1491
        %v1628 = vsub.f32 %v1278, %v1494
        %v1629 = vsub.f32 %v1280, %v1494
        %v1630 = vsub.f32 %v1284, %v1497
        %v1631 = vsub.f32 %v1286, %v1497
        %v1632 = vsub.f32 %v1290, %v1500
        %v1633 = vsub.f32 %v1292, %v1500
        %v1634 = vsub.f32 %v1296, %v1503
        %v1635 = vsub.f32 %v1298, %v1503
        %v1636 = vsub.f32 %v1302, %v1506
        %v1637 = vsub.f32 %v1304, %v1506
        %v1638 = vsub.f32 %v1308, %v1509
        %v1639 = vsub.f32 %v1310, %v1509
        %v1640 = vsub.f32 %v1314, %v1512
        %v1641 = vsub.f32 %v1316, %v1512
        %v1642 = vsub.f32 %v1320, %v1515
        %v1643 = vsub.f32 %v1322, %v1515
        %v1644 = vmul.f32 %v1516, 1.442695
        %v1645 = vpow.pop %v1644
        %v1646 = vmul.f32 %v1517, 1.442695
        %v1647 = vpow.pop %v1646
        %v1648 = vmul.f32 %v1518, 1.442695
        %v1649 = vpow.pop %v1648
        %v1650 = vmul.f32 %v1519, 1.442695
        %v1651 = vpow.pop %v1650
        %v1652 = vmul.f32 %v1520, 1.442695
        %v1653 = vpow.pop %v1652
        %v1654 = vmul.f32 %v1521, 1.442695
        %v1655 = vpow.pop %v1654
        %v1656 = vmul.f32 %v1522, 1.442695
        %v1657 = vpow.pop %v1656
        %v1658 = vmul.f32 %v1523, 1.442695
        %v1659 = vpow.pop %v1658
        %v1660 = vmul.f32 %v1524, 1.442695
        %v1661 = vpow.pop %v1660
        %v1662 = vmul.f32 %v1525, 1.442695
        %v1663 = vpow.pop %v1662
        %v1664 = vmul.f32 %v1526, 1.442695
        %v1665 = vpow.pop %v1664
        %v1666 = vmul.f32 %v1527, 1.442695
        %v1667 = vpow.pop %v1666
        %v1668 = vmul.f32 %v1528, 1.442695
        %v1669 = vpow.pop %v1668
        %v1670 = vmul.f32 %v1529, 1.442695
        %v1671 = vpow.pop %v1670
        %v1672 = vmul.f32 %v1530, 1.442695
        %v1673 = vpow.pop %v1672
        %v1674 = vmul.f32 %v1531, 1.442695
        %v1675 = vpow.pop %v1674
        %v1676 = vmul.f32 %v1532, 1.442695
        %v1677 = vpow.pop %v1676
        %v1678 = vmul.f32 %v1533, 1.442695
        %v1679 = vpow.pop %v1678
        %v1680 = vmul.f32 %v1534, 1.442695
        %v1681 = vpow.pop %v1680
        %v1682 = vmul.f32 %v1535, 1.442695
        %v1683 = vpow.pop %v1682
        %v1684 = vmul.f32 %v1536, 1.442695
        %v1685 = vpow.pop %v1684
        %v1686 = vmul.f32 %v1537, 1.442695
        %v1687 = vpow.pop %v1686
        %v1688 = vmul.f32 %v1538, 1.442695
        %v1689 = vpow.pop %v1688
        %v1690 = vmul.f32 %v1539, 1.442695
        %v1691 = vpow.pop %v1690
        %v1692 = vmul.f32 %v1540, 1.442695
        %v1693 = vpow.pop %v1692
        %v1694 = vmul.f32 %v1541, 1.442695
        %v1695 = vpow.pop %v1694
        %v1696 = vmul.f32 %v1542, 1.442695
        %v1697 = vpow.pop %v1696
        %v1698 = vmul.f32 %v1543, 1.442695
        %v1699 = vpow.pop %v1698
        %v1700 = vmul.f32 %v1544, 1.442695
        %v1701 = vpow.pop %v1700
        %v1702 = vmul.f32 %v1545, 1.442695
        %v1703 = vpow.pop %v1702
        %v1704 = vmul.f32 %v1546, 1.442695
        %v1705 = vpow.pop %v1704
        %v1706 = vmul.f32 %v1547, 1.442695
        %v1707 = vpow.pop %v1706
        %v1708 = vmul.f32 %v1548, 1.442695
        %v1709 = vpow.pop %v1708
        %v1710 = vmul.f32 %v1549, 1.442695
        %v1711 = vpow.pop %v1710
        %v1712 = vmul.f32 %v1550, 1.442695
        %v1713 = vpow.pop %v1712
        %v1714 = vmul.f32 %v1551, 1.442695
        %v1715 = vpow.pop %v1714
        %v1716 = vmul.f32 %v1552, 1.442695
        %v1717 = vpow.pop %v1716
        %v1718 = vmul.f32 %v1553, 1.442695
        %v1719 = vpow.pop %v1718
        %v1720 = vmul.f32 %v1554, 1.442695
        %v1721 = vpow.pop %v1720
        %v1722 = vmul.f32 %v1555, 1.442695
        %v1723 = vpow.pop %v1722
        %v1724 = vmul.f32 %v1556, 1.442695
        %v1725 = vpow.pop %v1724
        %v1726 = vmul.f32 %v1557, 1.442695
        %v1727 = vpow.pop %v1726
        %v1728 = vmul.f32 %v1558, 1.442695
        %v1729 = vpow.pop %v1728
        %v1730 = vmul.f32 %v1559, 1.442695
        %v1731 = vpow.pop %v1730
        %v1732 = vmul.f32 %v1560, 1.442695
        %v1733 = vpow.pop %v1732
        %v1734 = vmul.f32 %v1561, 1.442695
        %v1735 = vpow.pop %v1734
        %v1736 = vmul.f32 %v1562, 1.442695
        %v1737 = vpow.pop %v1736
        %v1738 = vmul.f32 %v1563, 1.442695
        %v1739 = vpow.pop %v1738
        %v1740 = vmul.f32 %v1564, 1.442695
        %v1741 = vpow.pop %v1740
        %v1742 = vmul.f32 %v1565, 1.442695
        %v1743 = vpow.pop %v1742
        %v1744 = vmul.f32 %v1566, 1.442695
        %v1745 = vpow.pop %v1744
        %v1746 = vmul.f32 %v1567, 1.442695
        %v1747 = vpow.pop %v1746
        %v1748 = vmul.f32 %v1568, 1.442695
        %v1749 = vpow.pop %v1748
        %v1750 = vmul.f32 %v1569, 1.442695
        %v1751 = vpow.pop %v1750
        %v1752 = vmul.f32 %v1570, 1.442695
        %v1753 = vpow.pop %v1752
        %v1754 = vmul.f32 %v1571, 1.442695
        %v1755 = vpow.pop %v1754
        %v1756 = vmul.f32 %v1572, 1.442695
        %v1757 = vpow.pop %v1756
        %v1758 = vmul.f32 %v1573, 1.442695
        %v1759 = vpow.pop %v1758
        %v1760 = vmul.f32 %v1574, 1.442695
        %v1761 = vpow.pop %v1760
        %v1762 = vmul.f32 %v1575, 1.442695
        %v1763 = vpow.pop %v1762
        %v1764 = vmul.f32 %v1576, 1.442695
        %v1765 = vpow.pop %v1764
        %v1766 = vmul.f32 %v1577, 1.442695
        %v1767 = vpow.pop %v1766
        %v1768 = vmul.f32 %v1578, 1.442695
        %v1769 = vpow.pop %v1768
        %v1770 = vmul.f32 %v1579, 1.442695
        %v1771 = vpow.pop %v1770
        %v1772 = vmul.f32 %v1580, 1.442695
        %v1773 = vpow.pop %v1772
        %v1774 = vmul.f32 %v1581, 1.442695
        %v1775 = vpow.pop %v1774
        %v1776 = vmul.f32 %v1582, 1.442695
        %v1777 = vpow.pop %v1776
        %v1778 = vmul.f32 %v1583, 1.442695
        %v1779 = vpow.pop %v1778
        %v1780 = vmul.f32 %v1584, 1.442695
        %v1781 = vpow.pop %v1780
        %v1782 = vmul.f32 %v1585, 1.442695
        %v1783 = vpow.pop %v1782
        %v1784 = vmul.f32 %v1586, 1.442695
        %v1785 = vpow.pop %v1784
        %v1786 = vmul.f32 %v1587, 1.442695
        %v1787 = vpow.pop %v1786
        %v1788 = vmul.f32 %v1588, 1.442695
        %v1789 = vpow.pop %v1788
        %v1790 = vmul.f32 %v1589, 1.442695
        %v1791 = vpow.pop %v1790
        %v1792 = vmul.f32 %v1590, 1.442695
        %v1793 = vpow.pop %v1792
        %v1794 = vmul.f32 %v1591, 1.442695
        %v1795 = vpow.pop %v1794
        %v1796 = vmul.f32 %v1592, 1.442695
        %v1797 = vpow.pop %v1796
        %v1798 = vmul.f32 %v1593, 1.442695
        %v1799 = vpow.pop %v1798
        %v1800 = vmul.f32 %v1594, 1.442695
        %v1801 = vpow.pop %v1800
        %v1802 = vmul.f32 %v1595, 1.442695
        %v1803 = vpow.pop %v1802
        %v1804 = vmul.f32 %v1596, 1.442695
        %v1805 = vpow.pop %v1804
        %v1806 = vmul.f32 %v1597, 1.442695
        %v1807 = vpow.pop %v1806
        %v1808 = vmul.f32 %v1598, 1.442695
        %v1809 = vpow.pop %v1808
        %v1810 = vmul.f32 %v1599, 1.442695
        %v1811 = vpow.pop %v1810
        %v1812 = vmul.f32 %v1600, 1.442695
        %v1813 = vpow.pop %v1812
        %v1814 = vmul.f32 %v1601, 1.442695
        %v1815 = vpow.pop %v1814
        %v1816 = vmul.f32 %v1602, 1.442695
        %v1817 = vpow.pop %v1816
        %v1818 = vmul.f32 %v1603, 1.442695
        %v1819 = vpow.pop %v1818
        %v1820 = vmul.f32 %v1604, 1.442695
        %v1821 = vpow.pop %v1820
        %v1822 = vmul.f32 %v1605, 1.442695
        %v1823 = vpow.pop %v1822
        %v1824 = vmul.f32 %v1606, 1.442695
        %v1825 = vpow.pop %v1824
        %v1826 = vmul.f32 %v1607, 1.442695
        %v1827 = vpow.pop %v1826
        %v1828 = vmul.f32 %v1608, 1.442695
        %v1829 = vpow.pop %v1828
        %v1830 = vmul.f32 %v1609, 1.442695
        %v1831 = vpow.pop %v1830
        %v1832 = vmul.f32 %v1610, 1.442695
        %v1833 = vpow.pop %v1832
        %v1834 = vmul.f32 %v1611, 1.442695
        %v1835 = vpow.pop %v1834
        %v1836 = vmul.f32 %v1612, 1.442695
        %v1837 = vpow.pop %v1836
        %v1838 = vmul.f32 %v1613, 1.442695
        %v1839 = vpow.pop %v1838
        %v1840 = vmul.f32 %v1614, 1.442695
        %v1841 = vpow.pop %v1840
        %v1842 = vmul.f32 %v1615, 1.442695
        %v1843 = vpow.pop %v1842
        %v1844 = vmul.f32 %v1616, 1.442695
        %v1845 = vpow.pop %v1844
        %v1846 = vmul.f32 %v1617, 1.442695
        %v1847 = vpow.pop %v1846
        %v1848 = vmul.f32 %v1618, 1.442695
        %v1849 = vpow.pop %v1848
        %v1850 = vmul.f32 %v1619, 1.442695
        %v1851 = vpow.pop %v1850
        %v1852 = vmul.f32 %v1620, 1.442695
        %v1853 = vpow.pop %v1852
        %v1854 = vmul.f32 %v1621, 1.442695
        %v1855 = vpow.pop %v1854
        %v1856 = vmul.f32 %v1622, 1.442695
        %v1857 = vpow.pop %v1856
        %v1858 = vmul.f32 %v1623, 1.442695
        %v1859 = vpow.pop %v1858
        %v1860 = vmul.f32 %v1624, 1.442695
        %v1861 = vpow.pop %v1860
        %v1862 = vmul.f32 %v1625, 1.442695
        %v1863 = vpow.pop %v1862
        %v1864 = vmul.f32 %v1626, 1.442695
        %v1865 = vpow.pop %v1864
        %v1866 = vmul.f32 %v1627, 1.442695
        %v1867 = vpow.pop %v1866
        %v1868 = vmul.f32 %v1628, 1.442695
        %v1869 = vpow.pop %v1868
        %v1870 = vmul.f32 %v1629, 1.442695
        %v1871 = vpow.pop %v1870
        %v1872 = vmul.f32 %v1630, 1.442695
        %v1873 = vpow.pop %v1872
        %v1874 = vmul.f32 %v1631, 1.442695
        %v1875 = vpow.pop %v1874
        %v1876 = vmul.f32 %v1632, 1.442695
        %v1877 = vpow.pop %v1876
        %v1878 = vmul.f32 %v1633, 1.442695
        %v1879 = vpow.pop %v1878
        %v1880 = vmul.f32 %v1634, 1.442695
        %v1881 = vpow.pop %v1880
        %v1882 = vmul.f32 %v1635, 1.442695
        %v1883 = vpow.pop %v1882
        %v1884 = vmul.f32 %v1636, 1.442695
        %v1885 = vpow.pop %v1884
        %v1886 = vmul.f32 %v1637, 1.442695
        %v1887 = vpow.pop %v1886
        %v1888 = vmul.f32 %v1638, 1.442695
        %v1889 = vpow.pop %v1888
        %v1890 = vmul.f32 %v1639, 1.442695
        %v1891 = vpow.pop %v1890
        %v1892 = vmul.f32 %v1640, 1.442695
        %v1893 = vpow.pop %v1892
        %v1894 = vmul.f32 %v1641, 1.442695
        %v1895 = vpow.pop %v1894
        %v1896 = vmul.f32 %v1642, 1.442695
        %v1897 = vpow.pop %v1896
        %v1898 = vmul.f32 %v1643, 1.442695
        %v1899 = vpow.pop %v1898
        %v1900 = vadd.f32 %v1645, %v1647
        %1901 = vadd.xlane.f32.xlu0 %v1900
        %v1902 = vpop.xlane.xlu0 %1901
        %v1903 = vadd.f32 %v1649, %v1651
        %1904 = vadd.xlane.f32.xlu0 %v1903
        %v1905 = vpop.xlane.xlu0 %1904
        %v1906 = vadd.f32 %v1653, %v1655
        %1907 = vadd.xlane.f32.xlu0 %v1906
        %v1908 = vpop.xlane.xlu0 %1907
        %v1909 = vadd.f32 %v1657, %v1659
        %1910 = vadd.xlane.f32.xlu0 %v1909
        %v1911 = vpop.xlane.xlu0 %1910
        %v1912 = vadd.f32 %v1661, %v1663
        %1913 = vadd.xlane.f32.xlu0 %v1912
        %v1914 = vpop.xlane.xlu0 %1913
        %v1915 = vadd.f32 %v1665, %v1667
        %1916 = vadd.xlane.f32.xlu0 %v1915
        %v1917 = vpop.xlane.xlu0 %1916
        %v1918 = vadd.f32 %v1669, %v1671
        %1919 = vadd.xlane.f32.xlu0 %v1918
        %v1920 = vpop.xlane.xlu0 %1919
        %v1921 = vadd.f32 %v1673, %v1675
        %1922 = vadd.xlane.f32.xlu0 %v1921
        %v1923 = vpop.xlane.xlu0 %1922
        %v1924 = vadd.f32 %v1677, %v1679
        %1925 = vadd.xlane.f32.xlu0 %v1924
        %v1926 = vpop.xlane.xlu0 %1925
        %v1927 = vadd.f32 %v1681, %v1683
        %1928 = vadd.xlane.f32.xlu0 %v1927
        %v1929 = vpop.xlane.xlu0 %1928
        %v1930 = vadd.f32 %v1685, %v1687
        %1931 = vadd.xlane.f32.xlu0 %v1930
        %v1932 = vpop.xlane.xlu0 %1931
        %v1933 = vadd.f32 %v1689, %v1691
        %1934 = vadd.xlane.f32.xlu0 %v1933
        %v1935 = vpop.xlane.xlu0 %1934
        %v1936 = vadd.f32 %v1693, %v1695
        %1937 = vadd.xlane.f32.xlu0 %v1936
        %v1938 = vpop.xlane.xlu0 %1937
        %v1939 = vadd.f32 %v1697, %v1699
        %1940 = vadd.xlane.f32.xlu0 %v1939
        %v1941 = vpop.xlane.xlu0 %1940
        %v1942 = vadd.f32 %v1701, %v1703
        %1943 = vadd.xlane.f32.xlu0 %v1942
        %v1944 = vpop.xlane.xlu0 %1943
        %v1945 = vadd.f32 %v1705, %v1707
        %1946 = vadd.xlane.f32.xlu0 %v1945
        %v1947 = vpop.xlane.xlu0 %1946
        %v1948 = vadd.f32 %v1709, %v1711
        %1949 = vadd.xlane.f32.xlu0 %v1948
        %v1950 = vpop.xlane.xlu0 %1949
        %v1951 = vadd.f32 %v1713, %v1715
        %1952 = vadd.xlane.f32.xlu0 %v1951
        %v1953 = vpop.xlane.xlu0 %1952
        %v1954 = vadd.f32 %v1717, %v1719
        %1955 = vadd.xlane.f32.xlu0 %v1954
        %v1956 = vpop.xlane.xlu0 %1955
        %v1957 = vadd.f32 %v1721, %v1723
        %1958 = vadd.xlane.f32.xlu0 %v1957
        %v1959 = vpop.xlane.xlu0 %1958
        %v1960 = vadd.f32 %v1725, %v1727
        %1961 = vadd.xlane.f32.xlu0 %v1960
        %v1962 = vpop.xlane.xlu0 %1961
        %v1963 = vadd.f32 %v1729, %v1731
        %1964 = vadd.xlane.f32.xlu0 %v1963
        %v1965 = vpop.xlane.xlu0 %1964
        %v1966 = vadd.f32 %v1733, %v1735
        %1967 = vadd.xlane.f32.xlu0 %v1966
        %v1968 = vpop.xlane.xlu0 %1967
        %v1969 = vadd.f32 %v1737, %v1739
        %1970 = vadd.xlane.f32.xlu0 %v1969
        %v1971 = vpop.xlane.xlu0 %1970
        %v1972 = vadd.f32 %v1741, %v1743
        %1973 = vadd.xlane.f32.xlu0 %v1972
        %v1974 = vpop.xlane.xlu0 %1973
        %v1975 = vadd.f32 %v1745, %v1747
        %1976 = vadd.xlane.f32.xlu0 %v1975
        %v1977 = vpop.xlane.xlu0 %1976
        %v1978 = vadd.f32 %v1749, %v1751
        %1979 = vadd.xlane.f32.xlu0 %v1978
        %v1980 = vpop.xlane.xlu0 %1979
        %v1981 = vadd.f32 %v1753, %v1755
        %1982 = vadd.xlane.f32.xlu0 %v1981
        %v1983 = vpop.xlane.xlu0 %1982
        %v1984 = vadd.f32 %v1757, %v1759
        %1985 = vadd.xlane.f32.xlu0 %v1984
        %v1986 = vpop.xlane.xlu0 %1985
        %v1987 = vadd.f32 %v1761, %v1763
        %1988 = vadd.xlane.f32.xlu0 %v1987
        %v1989 = vpop.xlane.xlu0 %1988
        %v1990 = vadd.f32 %v1765, %v1767
        %1991 = vadd.xlane.f32.xlu0 %v1990
        %v1992 = vpop.xlane.xlu0 %1991
        %v1993 = vadd.f32 %v1769, %v1771
        %1994 = vadd.xlane.f32.xlu0 %v1993
        %v1995 = vpop.xlane.xlu0 %1994
        %v1996 = vadd.f32 %v1773, %v1775
        %1997 = vadd.xlane.f32.xlu0 %v1996
        %v1998 = vpop.xlane.xlu0 %1997
        %v1999 = vadd.f32 %v1777, %v1779
        %2000 = vadd.xlane.f32.xlu0 %v1999
        %v2001 = vpop.xlane.xlu0 %2000
        %v2002 = vadd.f32 %v1781, %v1783
        %2003 = vadd.xlane.f32.xlu0 %v2002
        %v2004 = vpop.xlane.xlu0 %2003
        %v2005 = vadd.f32 %v1785, %v1787
        %2006 = vadd.xlane.f32.xlu0 %v2005
        %v2007 = vpop.xlane.xlu0 %2006
        %v2008 = vadd.f32 %v1789, %v1791
        %2009 = vadd.xlane.f32.xlu0 %v2008
        %v2010 = vpop.xlane.xlu0 %2009
        %v2011 = vadd.f32 %v1793, %v1795
        %2012 = vadd.xlane.f32.xlu0 %v2011
        %v2013 = vpop.xlane.xlu0 %2012
        %v2014 = vadd.f32 %v1797, %v1799
        %2015 = vadd.xlane.f32.xlu0 %v2014
        %v2016 = vpop.xlane.xlu0 %2015
        %v2017 = vadd.f32 %v1801, %v1803
        %2018 = vadd.xlane.f32.xlu0 %v2017
        %v2019 = vpop.xlane.xlu0 %2018
        %v2020 = vadd.f32 %v1805, %v1807
        %2021 = vadd.xlane.f32.xlu0 %v2020
        %v2022 = vpop.xlane.xlu0 %2021
        %v2023 = vadd.f32 %v1809, %v1811
        %2024 = vadd.xlane.f32.xlu0 %v2023
        %v2025 = vpop.xlane.xlu0 %2024
        %v2026 = vadd.f32 %v1813, %v1815
        %2027 = vadd.xlane.f32.xlu0 %v2026
        %v2028 = vpop.xlane.xlu0 %2027
        %v2029 = vadd.f32 %v1817, %v1819
        %2030 = vadd.xlane.f32.xlu0 %v2029
        %v2031 = vpop.xlane.xlu0 %2030
        %v2032 = vadd.f32 %v1821, %v1823
        %2033 = vadd.xlane.f32.xlu0 %v2032
        %v2034 = vpop.xlane.xlu0 %2033
        %v2035 = vadd.f32 %v1825, %v1827
        %2036 = vadd.xlane.f32.xlu0 %v2035
        %v2037 = vpop.xlane.xlu0 %2036
        %v2038 = vadd.f32 %v1829, %v1831
        %2039 = vadd.xlane.f32.xlu0 %v2038
        %v2040 = vpop.xlane.xlu0 %2039
        %v2041 = vadd.f32 %v1833, %v1835
        %2042 = vadd.xlane.f32.xlu0 %v2041
        %v2043 = vpop.xlane.xlu0 %2042
        %v2044 = vadd.f32 %v1837, %v1839
        %2045 = vadd.xlane.f32.xlu0 %v2044
        %v2046 = vpop.xlane.xlu0 %2045
        %v2047 = vadd.f32 %v1841, %v1843
        %2048 = vadd.xlane.f32.xlu0 %v2047
        %v2049 = vpop.xlane.xlu0 %2048
        %v2050 = vadd.f32 %v1845, %v1847
        %2051 = vadd.xlane.f32.xlu0 %v2050
        %v2052 = vpop.xlane.xlu0 %2051
        %v2053 = vadd.f32 %v1849, %v1851
        %2054 = vadd.xlane.f32.xlu0 %v2053
        %v2055 = vpop.xlane.xlu0 %2054
        %v2056 = vadd.f32 %v1853, %v1855
        %2057 = vadd.xlane.f32.xlu0 %v2056
        %v2058 = vpop.xlane.xlu0 %2057
        %v2059 = vadd.f32 %v1857, %v1859
        %2060 = vadd.xlane.f32.xlu0 %v2059
        %v2061 = vpop.xlane.xlu0 %2060
        %v2062 = vadd.f32 %v1861, %v1863
        %2063 = vadd.xlane.f32.xlu0 %v2062
        %v2064 = vpop.xlane.xlu0 %2063
        %v2065 = vadd.f32 %v1865, %v1867
        %2066 = vadd.xlane.f32.xlu0 %v2065
        %v2067 = vpop.xlane.xlu0 %2066
        %v2068 = vadd.f32 %v1869, %v1871
        %2069 = vadd.xlane.f32.xlu0 %v2068
        %v2070 = vpop.xlane.xlu0 %2069
        %v2071 = vadd.f32 %v1873, %v1875
        %2072 = vadd.xlane.f32.xlu0 %v2071
        %v2073 = vpop.xlane.xlu0 %2072
        %v2074 = vadd.f32 %v1877, %v1879
        %2075 = vadd.xlane.f32.xlu0 %v2074
        %v2076 = vpop.xlane.xlu0 %2075
        %v2077 = vadd.f32 %v1881, %v1883
        %2078 = vadd.xlane.f32.xlu0 %v2077
        %v2079 = vpop.xlane.xlu0 %2078
        %v2080 = vadd.f32 %v1885, %v1887
        %2081 = vadd.xlane.f32.xlu0 %v2080
        %v2082 = vpop.xlane.xlu0 %2081
        %v2083 = vadd.f32 %v1889, %v1891
        %2084 = vadd.xlane.f32.xlu0 %v2083
        %v2085 = vpop.xlane.xlu0 %2084
        %v2086 = vadd.f32 %v1893, %v1895
        %2087 = vadd.xlane.f32.xlu0 %v2086
        %v2088 = vpop.xlane.xlu0 %2087
        %v2089 = vadd.f32 %v1897, %v1899
        %2090 = vadd.xlane.f32.xlu0 %v2089
        %v2091 = vpop.xlane.xlu0 %2090
        %v2092 = vrcp.pop %v1902
        %v2093 = vrcp.pop %v1905
        %v2094 = vrcp.pop %v1908
        %v2095 = vrcp.pop %v1911
        %v2096 = vrcp.pop %v1914
        %v2097 = vrcp.pop %v1917
        %v2098 = vrcp.pop %v1920
        %v2099 = vrcp.pop %v1923
        %v2100 = vrcp.pop %v1926
        %v2101 = vrcp.pop %v1929
        %v2102 = vrcp.pop %v1932
        %v2103 = vrcp.pop %v1935
        %v2104 = vrcp.pop %v1938
        %v2105 = vrcp.pop %v1941
        %v2106 = vrcp.pop %v1944
        %v2107 = vrcp.pop %v1947
        %v2108 = vrcp.pop %v1950
        %v2109 = vrcp.pop %v1953
        %v2110 = vrcp.pop %v1956
        %v2111 = vrcp.pop %v1959
        %v2112 = vrcp.pop %v1962
        %v2113 = vrcp.pop %v1965
        %v2114 = vrcp.pop %v1968
        %v2115 = vrcp.pop %v1971
        %v2116 = vrcp.pop %v1974
        %v2117 = vrcp.pop %v1977
        %v2118 = vrcp.pop %v1980
        %v2119 = vrcp.pop %v1983
        %v2120 = vrcp.pop %v1986
        %v2121 = vrcp.pop %v1989
        %v2122 = vrcp.pop %v1992
        %v2123 = vrcp.pop %v1995
        %v2124 = vrcp.pop %v1998
        %v2125 = vrcp.pop %v2001
        %v2126 = vrcp.pop %v2004
        %v2127 = vrcp.pop %v2007
        %v2128 = vrcp.pop %v2010
        %v2129 = vrcp.pop %v2013
        %v2130 = vrcp.pop %v2016
        %v2131 = vrcp.pop %v2019
        %v2132 = vrcp.pop %v2022
        %v2133 = vrcp.pop %v2025
        %v2134 = vrcp.pop %v2028
        %v2135 = vrcp.pop %v2031
        %v2136 = vrcp.pop %v2034
        %v2137 = vrcp.pop %v2037
        %v2138 = vrcp.pop %v2040
        %v2139 = vrcp.pop %v2043
        %v2140 = vrcp.pop %v2046
        %v2141 = vrcp.pop %v2049
        %v2142 = vrcp.pop %v2052
        %v2143 = vrcp.pop %v2055
        %v2144 = vrcp.pop %v2058
        %v2145 = vrcp.pop %v2061
        %v2146 = vrcp.pop %v2064
        %v2147 = vrcp.pop %v2067
        %v2148 = vrcp.pop %v2070
        %v2149 = vrcp.pop %v2073
        %v2150 = vrcp.pop %v2076
        %v2151 = vrcp.pop %v2079
        %v2152 = vrcp.pop %v2082
        %v2153 = vrcp.pop %v2085
        %v2154 = vrcp.pop %v2088
        %v2155 = vrcp.pop %v2091
        %v2156 = vmul.f32 %v1645, %v2092
        %v2157 = vmul.f32 %v1647, %v2092
        %v2158 = vmul.f32 %v1649, %v2093
        %v2159 = vmul.f32 %v1651, %v2093
        %v2160 = vmul.f32 %v1653, %v2094
        %v2161 = vmul.f32 %v1655, %v2094
        %v2162 = vmul.f32 %v1657, %v2095
        %v2163 = vmul.f32 %v1659, %v2095
        %v2164 = vmul.f32 %v1661, %v2096
        %v2165 = vmul.f32 %v1663, %v2096
        %v2166 = vmul.f32 %v1665, %v2097
        %v2167 = vmul.f32 %v1667, %v2097
        %v2168 = vmul.f32 %v1669, %v2098
        %v2169 = vmul.f32 %v1671, %v2098
        %v2170 = vmul.f32 %v1673, %v2099
        %v2171 = vmul.f32 %v1675, %v2099
        %v2172 = vmul.f32 %v1677, %v2100
        %v2173 = vmul.f32 %v1679, %v2100
        %v2174 = vmul.f32 %v1681, %v2101
        %v2175 = vmul.f32 %v1683, %v2101
        %v2176 = vmul.f32 %v1685, %v2102
        %v2177 = vmul.f32 %v1687, %v2102
        %v2178 = vmul.f32 %v1689, %v2103
        %v2179 = vmul.f32 %v1691, %v2103
        %v2180 = vmul.f32 %v1693, %v2104
        %v2181 = vmul.f32 %v1695, %v2104
        %v2182 = vmul.f32 %v1697, %v2105
        %v2183 = vmul.f32 %v1699, %v2105
        %v2184 = vmul.f32 %v1701, %v2106
        %v2185 = vmul.f32 %v1703, %v2106
        %v2186 = vmul.f32 %v1705, %v2107
        %v2187 = vmul.f32 %v1707, %v2107
        %v2188 = vmul.f32 %v1709, %v2108
        %v2189 = vmul.f32 %v1711, %v2108
        %v2190 = vmul.f32 %v1713, %v2109
        %v2191 = vmul.f32 %v1715, %v2109
        %v2192 = vmul.f32 %v1717, %v2110
        %v2193 = vmul.f32 %v1719, %v2110
        %v2194 = vmul.f32 %v1721, %v2111
        %v2195 = vmul.f32 %v1723, %v2111
        %v2196 = vmul.f32 %v1725, %v2112
        %v2197 = vmul.f32 %v1727, %v2112
        %v2198 = vmul.f32 %v1729, %v2113
        %v2199 = vmul.f32 %v1731, %v2113
        %v2200 = vmul.f32 %v1733, %v2114
        %v2201 = vmul.f32 %v1735, %v2114
        %v2202 = vmul.f32 %v1737, %v2115
        %v2203 = vmul.f32 %v1739, %v2115
        %v2204 = vmul.f32 %v1741, %v2116
        %v2205 = vmul.f32 %v1743, %v2116
        %v2206 = vmul.f32 %v1745, %v2117
        %v2207 = vmul.f32 %v1747, %v2117
        %v2208 = vmul.f32 %v1749, %v2118
        %v2209 = vmul.f32 %v1751, %v2118
        %v2210 = vmul.f32 %v1753, %v2119
        %v2211 = vmul.f32 %v1755, %v2119
        %v2212 = vmul.f32 %v1757, %v2120
        %v2213 = vmul.f32 %v1759, %v2120
        %v2214 = vmul.f32 %v1761, %v2121
        %v2215 = vmul.f32 %v1763, %v2121
        %v2216 = vmul.f32 %v1765, %v2122
        %v2217 = vmul.f32 %v1767, %v2122
        %v2218 = vmul.f32 %v1769, %v2123
        %v2219 = vmul.f32 %v1771, %v2123
        %v2220 = vmul.f32 %v1773, %v2124
        %v2221 = vmul.f32 %v1775, %v2124
        %v2222 = vmul.f32 %v1777, %v2125
        %v2223 = vmul.f32 %v1779, %v2125
        %v2224 = vmul.f32 %v1781, %v2126
        %v2225 = vmul.f32 %v1783, %v2126
        %v2226 = vmul.f32 %v1785, %v2127
        %v2227 = vmul.f32 %v1787, %v2127
        %v2228 = vmul.f32 %v1789, %v2128
        %v2229 = vmul.f32 %v1791, %v2128
        %v2230 = vmul.f32 %v1793, %v2129
        %v2231 = vmul.f32 %v1795, %v2129
        %v2232 = vmul.f32 %v1797, %v2130
        %v2233 = vmul.f32 %v1799, %v2130
        %v2234 = vmul.f32 %v1801, %v2131
        %v2235 = vmul.f32 %v1803, %v2131
        %v2236 = vmul.f32 %v1805, %v2132
        %v2237 = vmul.f32 %v1807, %v2132
        %v2238 = vmul.f32 %v1809, %v2133
        %v2239 = vmul.f32 %v1811, %v2133
        %v2240 = vmul.f32 %v1813, %v2134
        %v2241 = vmul.f32 %v1815, %v2134
        %v2242 = vmul.f32 %v1817, %v2135
        %v2243 = vmul.f32 %v1819, %v2135
        %v2244 = vmul.f32 %v1821, %v2136
        %v2245 = vmul.f32 %v1823, %v2136
        %v2246 = vmul.f32 %v1825, %v2137
        %v2247 = vmul.f32 %v1827, %v2137
        %v2248 = vmul.f32 %v1829, %v2138
        %v2249 = vmul.f32 %v1831, %v2138
        %v2250 = vmul.f32 %v1833, %v2139
        %v2251 = vmul.f32 %v1835, %v2139
        %v2252 = vmul.f32 %v1837, %v2140
        %v2253 = vmul.f32 %v1839, %v2140
        %v2254 = vmul.f32 %v1841, %v2141
        %v2255 = vmul.f32 %v1843, %v2141
        %v2256 = vmul.f32 %v1845, %v2142
        %v2257 = vmul.f32 %v1847, %v2142
        %v2258 = vmul.f32 %v1849, %v2143
        %v2259 = vmul.f32 %v1851, %v2143
        %v2260 = vmul.f32 %v1853, %v2144
        %v2261 = vmul.f32 %v1855, %v2144
        %v2262 = vmul.f32 %v1857, %v2145
        %v2263 = vmul.f32 %v1859, %v2145
        %v2264 = vmul.f32 %v1861, %v2146
        %v2265 = vmul.f32 %v1863, %v2146
        %v2266 = vmul.f32 %v1865, %v2147
        %v2267 = vmul.f32 %v1867, %v2147
        %v2268 = vmul.f32 %v1869, %v2148
        %v2269 = vmul.f32 %v1871, %v2148
        %v2270 = vmul.f32 %v1873, %v2149
        %v2271 = vmul.f32 %v1875, %v2149
        %v2272 = vmul.f32 %v1877, %v2150
        %v2273 = vmul.f32 %v1879, %v2150
        %v2274 = vmul.f32 %v1881, %v2151
        %v2275 = vmul.f32 %v1883, %v2151
        %v2276 = vmul.f32 %v1885, %v2152
        %v2277 = vmul.f32 %v1887, %v2152
        %v2278 = vmul.f32 %v1889, %v2153
        %v2279 = vmul.f32 %v1891, %v2153
        %v2280 = vmul.f32 %v1893, %v2154
        %v2281 = vmul.f32 %v1895, %v2154
        %v2282 = vmul.f32 %v1897, %v2155
        %v2283 = vmul.f32 %v1899, %v2155
        %2284 = vmatprep.subr.mxu0 %v2187
        %2285 = vmatpush1.xpose.msra.mxu0 %v2186
        %2286 = vmatprep.subr.mxu0 %v2185
        %2287 = vmatpush1.xpose.msra.mxu0 %v2184
        %2288 = vmatprep.subr.mxu0 %v2183
        %2289 = vmatpush1.xpose.msra.mxu0 %v2182
        %2290 = vmatprep.subr.mxu0 %v2181
        %2291 = vmatpush1.xpose.msra.mxu0 %v2180
        %2292 = vmatprep.subr.mxu0 %v2179
        %2293 = vmatpush1.xpose.msra.mxu0 %v2178
        %2294 = vmatprep.subr.mxu0 %v2177
        %2295 = vmatpush1.xpose.msra.mxu0 %v2176
        %2296 = vmatprep.subr.mxu0 %v2175
        %2297 = vmatpush1.xpose.msra.mxu0 %v2174
        %2298 = vmatprep.subr.mxu0 %v2173
        %2299 = vmatpush1.xpose.msra.mxu0 %v2172
        %2300 = vmatprep.subr.mxu0 %v2171
        %2301 = vmatpush1.xpose.msra.mxu0 %v2170
        %2302 = vmatprep.subr.mxu0 %v2169
        %2303 = vmatpush1.xpose.msra.mxu0 %v2168
        %2304 = vmatprep.subr.mxu0 %v2167
        %2305 = vmatpush1.xpose.msra.mxu0 %v2166
        %2306 = vmatprep.subr.mxu0 %v2165
        %2307 = vmatpush1.xpose.msra.mxu0 %v2164
        %2308 = vmatprep.subr.mxu0 %v2163
        %2309 = vmatpush1.xpose.msra.mxu0 %v2162
        %2310 = vmatprep.subr.mxu0 %v2161
        %2311 = vmatpush1.xpose.msra.mxu0 %v2160
        %2312 = vmatprep.subr.mxu0 %v2159
        %2313 = vmatpush1.xpose.msra.mxu0 %v2158
        %2314 = vmatprep.subr.mxu0 %v2157
        %2315 = vmatpush1.xpose.msra.mxu0 %v2156
        %2316 = vmatprep.subr.mxu0 %v2219
        %2317 = vmatpush2.xpose.msra.mxu0 %v2218
        %2318 = vmatprep.subr.mxu0 %v2217
        %2319 = vmatpush2.xpose.msra.mxu0 %v2216
        %2320 = vmatprep.subr.mxu0 %v2215
        %2321 = vmatpush2.xpose.msra.mxu0 %v2214
        %2322 = vmatprep.subr.mxu0 %v2213
        %2323 = vmatpush2.xpose.msra.mxu0 %v2212
        %2324 = vmatprep.subr.mxu0 %v2211
        %2325 = vmatpush2.xpose.msra.mxu0 %v2210
        %2326 = vmatprep.subr.mxu0 %v2209
        %2327 = vmatpush2.xpose.msra.mxu0 %v2208
        %2328 = vmatprep.subr.mxu0 %v2207
        %2329 = vmatpush2.xpose.msra.mxu0 %v2206
        %2330 = vmatprep.subr.mxu0 %v2205
        %2331 = vmatpush2.xpose.msra.mxu0 %v2204
        %2332 = vmatprep.subr.mxu0 %v2203
        %2333 = vmatpush2.xpose.msra.mxu0 %v2202
        %2334 = vmatprep.subr.mxu0 %v2201
        %2335 = vmatpush2.xpose.msra.mxu0 %v2200
        %2336 = vmatprep.subr.mxu0 %v2199
        %2337 = vmatpush2.xpose.msra.mxu0 %v2198
        %2338 = vmatprep.subr.mxu0 %v2197
        %2339 = vmatpush2.xpose.msra.mxu0 %v2196
        %2340 = vmatprep.subr.mxu0 %v2195
        %2341 = vmatpush2.xpose.msra.mxu0 %v2194
        %2342 = vmatprep.subr.mxu0 %v2193
        %2343 = vmatpush2.xpose.msra.mxu0 %v2192
        %2344 = vmatprep.subr.mxu0 %v2191
        %2345 = vmatpush2.xpose.msra.mxu0 %v2190
        %2346 = vmatprep.subr.mxu0 %v2189
        %2347 = vmatpush2.xpose.msra.mxu0 %v2188
        %2348 = vmatprep.mubr.f32.mxu0 %v469
        %2349 = vmatmul.mubr.f32.gmra.mxu0 %v467
        %v2350 = vpop.f32.mrf.mxu0
        %v2351 = vadd.f32 0.0, %v2350
        %v2352 = vpop.f32.mrf.mxu0
        %v2353 = vadd.f32 0.0, %v2352
        %2354 = vmatprep.mubr.f32.mxu0 %v475
        %2355 = vmatmul.mubr.f32.gmra.mxu0 %v473
        %v2356 = vpop.f32.mrf.mxu0
        %v2357 = vadd.f32 0.0, %v2356
        %v2358 = vpop.f32.mrf.mxu0
        %v2359 = vadd.f32 0.0, %v2358
        %2360 = vdwg.mxu0
        %2361 = vmatprep.subr.mxu0 %v2251
        %2362 = vmatpush1.xpose.msra.mxu0 %v2250
        %2363 = vmatprep.subr.mxu0 %v2249
        %2364 = vmatpush1.xpose.msra.mxu0 %v2248
        %2365 = vmatprep.subr.mxu0 %v2247
        %2366 = vmatpush1.xpose.msra.mxu0 %v2246
        %2367 = vmatprep.subr.mxu0 %v2245
        %2368 = vmatpush1.xpose.msra.mxu0 %v2244
        %2369 = vmatprep.subr.mxu0 %v2243
        %2370 = vmatpush1.xpose.msra.mxu0 %v2242
        %2371 = vmatprep.subr.mxu0 %v2241
        %2372 = vmatpush1.xpose.msra.mxu0 %v2240
        %2373 = vmatprep.subr.mxu0 %v2239
        %2374 = vmatpush1.xpose.msra.mxu0 %v2238
        %2375 = vmatprep.subr.mxu0 %v2237
        %2376 = vmatpush1.xpose.msra.mxu0 %v2236
        %2377 = vmatprep.subr.mxu0 %v2235
        %2378 = vmatpush1.xpose.msra.mxu0 %v2234
        %2379 = vmatprep.subr.mxu0 %v2233
        %2380 = vmatpush1.xpose.msra.mxu0 %v2232
        %2381 = vmatprep.subr.mxu0 %v2231
        %2382 = vmatpush1.xpose.msra.mxu0 %v2230
        %2383 = vmatprep.subr.mxu0 %v2229
        %2384 = vmatpush1.xpose.msra.mxu0 %v2228
        %2385 = vmatprep.subr.mxu0 %v2227
        %2386 = vmatpush1.xpose.msra.mxu0 %v2226
        %2387 = vmatprep.subr.mxu0 %v2225
        %2388 = vmatpush1.xpose.msra.mxu0 %v2224
        %2389 = vmatprep.subr.mxu0 %v2223
        %2390 = vmatpush1.xpose.msra.mxu0 %v2222
        %2391 = vmatprep.subr.mxu0 %v2221
        %2392 = vmatpush1.xpose.msra.mxu0 %v2220
        %2393 = vmatprep.subr.mxu0 %v2283
        %2394 = vmatpush2.xpose.msra.mxu0 %v2282
        %2395 = vmatprep.subr.mxu0 %v2281
        %2396 = vmatpush2.xpose.msra.mxu0 %v2280
        %2397 = vmatprep.subr.mxu0 %v2279
        %2398 = vmatpush2.xpose.msra.mxu0 %v2278
        %2399 = vmatprep.subr.mxu0 %v2277
        %2400 = vmatpush2.xpose.msra.mxu0 %v2276
        %2401 = vmatprep.subr.mxu0 %v2275
        %2402 = vmatpush2.xpose.msra.mxu0 %v2274
        %2403 = vmatprep.subr.mxu0 %v2273
        %2404 = vmatpush2.xpose.msra.mxu0 %v2272
        %2405 = vmatprep.subr.mxu0 %v2271
        %2406 = vmatpush2.xpose.msra.mxu0 %v2270
        %2407 = vmatprep.subr.mxu0 %v2269
        %2408 = vmatpush2.xpose.msra.mxu0 %v2268
        %2409 = vmatprep.subr.mxu0 %v2267
        %2410 = vmatpush2.xpose.msra.mxu0 %v2266
        %2411 = vmatprep.subr.mxu0 %v2265
        %2412 = vmatpush2.xpose.msra.mxu0 %v2264
        %2413 = vmatprep.subr.mxu0 %v2263
        %2414 = vmatpush2.xpose.msra.mxu0 %v2262
        %2415 = vmatprep.subr.mxu0 %v2261
        %2416 = vmatpush2.xpose.msra.mxu0 %v2260
        %2417 = vmatprep.subr.mxu0 %v2259
        %2418 = vmatpush2.xpose.msra.mxu0 %v2258
        %2419 = vmatprep.subr.mxu0 %v2257
        %2420 = vmatpush2.xpose.msra.mxu0 %v2256
        %2421 = vmatprep.subr.mxu0 %v2255
        %2422 = vmatpush2.xpose.msra.mxu0 %v2254
        %2423 = vmatprep.subr.mxu0 %v2253
        %2424 = vmatpush2.xpose.msra.mxu0 %v2252
        %2425 = vmatprep.mubr.f32.mxu0 %v481
        %2426 = vmatmul.mubr.f32.gmra.mxu0 %v479
        %v2427 = vpop.f32.mrf.mxu0
        %v2428 = vadd.f32 0.0, %v2427
        %v2429 = vpop.f32.mrf.mxu0
        %v2430 = vadd.f32 0.0, %v2429
        %2431 = vmatprep.mubr.f32.mxu0 %v487
        %2432 = vmatmul.mubr.f32.gmra.mxu0 %v485
        %v2433 = vpop.f32.mrf.mxu0
        %v2434 = vadd.f32 0.0, %v2433
        %v2435 = vpop.f32.mrf.mxu0
        %v2436 = vadd.f32 0.0, %v2435
        %2437 = vdwg.mxu0
        %v2438 = vld [vmem:[%s3] sm:$0xff]
        %v2439 = vld [vmem:[%s3 + $0x8] sm:$0xff]
        %v2440 = vld [vmem:[%s3 + $0x10] sm:$0xff]
        %v2441 = vld [vmem:[%s3 + $0x18] sm:$0xff]
        %v2442 = vld [vmem:[%s4] sm:$0xff]
        %v2443 = vld [vmem:[%s4 + $0x8] sm:$0xff]
        %v2444 = vld [vmem:[%s4 + $0x10] sm:$0xff]
        %v2445 = vld [vmem:[%s4 + $0x18] sm:$0xff]
        %2447 = vset.pattern.permute.xlu0 0
        %2448 = vperm.xlu0 %2447, %v2442
        %v2449 = vpop.permute.xlu0 %2448
        %2452 = vset.pattern.permute.xlu0 0
        %2453 = vperm.xlu0 %2452, %v2443
        %v2454 = vpop.permute.xlu0 %2453
        %2457 = vset.pattern.permute.xlu0 0
        %2458 = vperm.xlu0 %2457, %v2444
        %v2459 = vpop.permute.xlu0 %2458
        %2462 = vset.pattern.permute.xlu0 0
        %2463 = vperm.xlu0 %2462, %v2445
        %v2464 = vpop.permute.xlu0 %2463
        %v2467 = vsel %vm315, %v2438, 0
        %v2470 = vsel %vm315, %v2439, 0
        %v2473 = vsel %vm315, %v2440, 0
        %v2476 = vsel %vm315, %v2441, 0
        %2478 = vmatprep.subr.mxu0 0.0
        %2479 = vmatpush1.msra.mxu0 0.0
        %2480 = vmatprep.subr.mxu0 0.0
        %2481 = vmatpush1.msra.mxu0 0.0
        %2482 = vmatprep.subr.mxu0 0.0
        %2483 = vmatpush1.msra.mxu0 0.0
        %2484 = vmatprep.subr.mxu0 0.0
        %2485 = vmatpush1.msra.mxu0 0.0
        %2486 = vmatprep.subr.mxu0 0.0
        %2487 = vmatpush1.msra.mxu0 0.0
        %2488 = vmatprep.subr.mxu0 0.0
        %2489 = vmatpush1.msra.mxu0 0.0
        %2490 = vmatprep.subr.mxu0 0.0
        %2491 = vmatpush1.msra.mxu0 0.0
        %2492 = vmatprep.subr.mxu0 0.0
        %2493 = vmatpush1.msra.mxu0 0.0
        %2494 = vmatprep.subr.mxu0 0.0
        %2495 = vmatpush1.msra.mxu0 0.0
        %2496 = vmatprep.subr.mxu0 0.0
        %2497 = vmatpush1.msra.mxu0 0.0
        %2498 = vmatprep.subr.mxu0 0.0
        %2499 = vmatpush1.msra.mxu0 0.0
        %2500 = vmatprep.subr.mxu0 0.0
        %2501 = vmatpush1.msra.mxu0 0.0
        %2502 = vmatprep.subr.mxu0 %v2436
        %2503 = vmatpush1.msra.mxu0 %v2434
        %2504 = vmatprep.subr.mxu0 %v2430
        %2505 = vmatpush1.msra.mxu0 %v2428
        %2506 = vmatprep.subr.mxu0 %v2359
        %2507 = vmatpush1.msra.mxu0 %v2357
        %2508 = vmatprep.subr.mxu0 %v2353
        %2509 = vmatpush1.msra.mxu0 %v2351
        %2510 = vmatprep.subr.mxu0 0.0
        %2511 = vmatpush2.msra.mxu0 0.0
        %2512 = vmatprep.subr.mxu0 0.0
        %2513 = vmatpush2.msra.mxu0 0.0
        %2514 = vmatprep.subr.mxu0 0.0
        %2515 = vmatpush2.msra.mxu0 0.0
        %2516 = vmatprep.subr.mxu0 0.0
        %2517 = vmatpush2.msra.mxu0 0.0
        %2518 = vmatprep.subr.mxu0 0.0
        %2519 = vmatpush2.msra.mxu0 0.0
        %2520 = vmatprep.subr.mxu0 0.0
        %2521 = vmatpush2.msra.mxu0 0.0
        %2522 = vmatprep.subr.mxu0 0.0
        %2523 = vmatpush2.msra.mxu0 0.0
        %2524 = vmatprep.subr.mxu0 0.0
        %2525 = vmatpush2.msra.mxu0 0.0
        %2526 = vmatprep.subr.mxu0 0.0
        %2527 = vmatpush2.msra.mxu0 0.0
        %2528 = vmatprep.subr.mxu0 0.0
        %2529 = vmatpush2.msra.mxu0 0.0
        %2530 = vmatprep.subr.mxu0 0.0
        %2531 = vmatpush2.msra.mxu0 0.0
        %2532 = vmatprep.subr.mxu0 0.0
        %2533 = vmatpush2.msra.mxu0 0.0
        %2534 = vmatprep.subr.mxu0 0.0
        %2535 = vmatpush2.msra.mxu0 0.0
        %2536 = vmatprep.subr.mxu0 0.0
        %2537 = vmatpush2.msra.mxu0 0.0
        %2538 = vmatprep.subr.mxu0 0.0
        %2539 = vmatpush2.msra.mxu0 0.0
        %2540 = vmatprep.subr.mxu0 0.0
        %2541 = vmatpush2.msra.mxu0 0.0
        %2542 = vmatprep.mubr.f32.mxu0 0.0
        %2543 = vmatmul.mubr.f32.gmra.mxu0 %v2467
        %v2544 = vpop.f32.mrf.mxu0
        %v2545 = vadd.f32 %v2449, %v2544
        %v2546 = vpop.f32.mrf.mxu0
        %v2547 = vadd.f32 %v2449, %v2546
        %2548 = vmatprep.mubr.f32.mxu0 0.0
        %2549 = vmatmul.mubr.f32.gmra.mxu0 %v2470
        %v2550 = vpop.f32.mrf.mxu0
        %v2551 = vadd.f32 %v2454, %v2550
        %v2552 = vpop.f32.mrf.mxu0
        %v2553 = vadd.f32 %v2454, %v2552
        %2554 = vmatprep.mubr.f32.mxu0 0.0
        %2555 = vmatmul.mubr.f32.gmra.mxu0 %v2473
        %v2556 = vpop.f32.mrf.mxu0
        %v2557 = vadd.f32 %v2459, %v2556
        %v2558 = vpop.f32.mrf.mxu0
        %v2559 = vadd.f32 %v2459, %v2558
        %2560 = vmatprep.mubr.f32.mxu0 0.0
        %2561 = vmatmul.mubr.f32.gmra.mxu0 %v2476
        %v2562 = vpop.f32.mrf.mxu0
        %v2563 = vadd.f32 %v2464, %v2562
        %v2564 = vpop.f32.mrf.mxu0
        %v2565 = vadd.f32 %v2464, %v2564
        %2566 = vdwg.mxu0
        %v2567 = vadd.f32 %v2545, %v223
        %v2568 = vadd.f32 %v2547, %v224
        %v2569 = vadd.f32 %v2551, %v225
        %v2570 = vadd.f32 %v2553, %v226
        %v2571 = vadd.f32 %v2557, %v227
        %v2572 = vadd.f32 %v2559, %v228
        %v2573 = vadd.f32 %v2563, %v229
        %v2574 = vadd.f32 %v2565, %v230
        %2575 = vst [vmem:[%s217] sm:$0xff] %v2567
        %2576 = vst [vmem:[%s217 + $0x8] sm:$0xff] %v2568
        %2577 = vst [vmem:[%s217 + $0x10] sm:$0xff] %v2569
        %2578 = vst [vmem:[%s217 + $0x18] sm:$0xff] %v2570
        %2579 = vst [vmem:[%s217 + $0x20] sm:$0xff] %v2571
        %2580 = vst [vmem:[%s217 + $0x28] sm:$0xff] %v2572
        %2581 = vst [vmem:[%s217 + $0x30] sm:$0xff] %v2573
        %2582 = vst [vmem:[%s217 + $0x38] sm:$0xff] %v2574
        %s2583 = sand.u32 %s137, 1
        %s2584 = scalar_lea.sflag [#allocation3], %s2583
        %s2585 = sand.u32 %s137, 1
        %s2586 = smul.addr %s2585, 64
        %s2587 = scalar_lea.vmem [#allocation2], %s2586
        // Predicated region
        $region41: #{tpu_custom_call.1} parent=39 // pred_check
          %p2588 = pneg %p147
        $region42: #{tpu_custom_call.1} parent=39 // pred_check_branch
          %2590 = sbr.rel (%p2588) target = $region44
        $region43: #{tpu_custom_call.1} parent=39 // pred_region
          %s2592 = ssub.s32 1024, 1024
          %2593 = vsyncadd %s2584, %s2592
          %s2594 = smul.addr %s19, 8
          %s2595 = smul.addr %s2594, 128
          %s2596 = scalar_lea.hbm %s5, %s2595
          %s2597 = sshll.u32 %s2587, 4
          %s2598 = int_to_ptr.vmem [resolvable:$true] %s2597
          %2603 = dma.vmem_to_hbm [thread:$0]  %s2598, 1024, %s2596, %s2584, 256, 256, 16
        $region44: #{tpu_custom_call.1} parent=39 // pred_fallthru
          _
      $region40: #{tpu_custom_call.1} parent=5 // pred_fallthru
        _
      %p2604 = scmp.le.s32.totalorder 2, %s14
      // Predicated region
      $region45: #{tpu_custom_call.1} parent=5 // pred_check
        %p2605 = pneg %p2604
      $region46: #{tpu_custom_call.1} parent=5 // pred_check_branch
        %2607 = sbr.rel (%p2605) target = $region48
      $region47: #{tpu_custom_call.1} parent=5 // pred_region
        %s2608 = ssub.s32 %s14, 2
        // Predicated region
        $region49: #{tpu_custom_call.1} parent=47 // pred_check
          %p2609 = pneg %p153
        $region50: #{tpu_custom_call.1} parent=47 // pred_check_branch
          %2611 = sbr.rel (%p2609) target = $region52
        $region51: #{tpu_custom_call.1} parent=47 // pred_region
          %s2612 = sand.u32 %s138, 1
          %s2613 = scalar_lea.sflag [#allocation3], %s2612
          %s2614 = sand.u32 %s138, 1
          %s2615 = smul.addr %s2614, 64
          %s2616 = scalar_lea.vmem [#allocation2], %s2615
          %2617 = dma.done %s2613, 1024
        $region52: #{tpu_custom_call.1} parent=47 // pred_fallthru
          _
      $region48: #{tpu_custom_call.1} parent=5 // pred_fallthru
        _
    $region6: #{tpu_custom_call.1} parent=1 // loop_footer
      %s18 = sadd.s32 1, %s14
    $region7: #{tpu_custom_call.1} parent=1 // loop_footer_branch
      %13 = sbr.rel target = $region3
    $region8: #{tpu_custom_call.1} parent=1 // loop_exit
      _
    %2618 = vsyncpa [#allocation3], 1
    %s2619 = scalar_lea.sflag [#allocation3], 1
    %2620 = vsyncpa %s2619, 1

</llo_original>
